<compile_context>
chip_gen: v7x
topology: tpu7x:2x2x1
jax: 0.10.0
libtpu: 0.0.40
codegen_flags: <defaults>
</compile_context>

<pallas_src>
import functools

import jax
import jax.numpy as jnp
from jax import lax
from jax.experimental import pallas as pl
from jax.experimental.pallas import tpu as pltpu


def _round_up(v, m):
    return (v + m - 1) // m * m


# ----------------------------------------------------------------------------
# Pass 1: LSTM recurrence over time blocks.
# ----------------------------------------------------------------------------
def lstm_block_kernel(x_ref, h0_ref, c0_ref, w_ih_ref, w_hh_ref, b_ref,
                      h_all_ref, hn_ref, cn_ref,
                      xp_sc, h_sc, c_sc,
                      *, hidden_pad, t_block, n_pad, seq_len):
    """One time-block of the LSTM recurrence.

    x_ref:     (Tb*Np, E)     input rows for this block, ordered (t, n)
    h0/c0:     (Np, Hp)       initial state (consumed only on grid step 0)
    w_ih:      (E, 4*Hp)      gate g occupies columns [g*Hp, g*Hp + H)
    w_hh:      (Hp, 4*Hp)     same gate layout
    b:         (1, 4*Hp)      folded bias (b_ih + b_hh), same layout
    h_all_ref: (Tb*Np, Hp)    per-step hidden states for this block (output)
    hn/cn_ref: (Np, Hp)       final state (resident block, written each step)
    xp_sc:     (Tb*Np, 4*Hp)  scratch: X@W_ih + b for this block
    h_sc/c_sc: (Np, Hp)       scratch carrying state across grid steps
    """
    Hp, Tb, Np = hidden_pad, t_block, n_pad
    ti = pl.program_id(0)

    @pl.when(ti == 0)
    def _():
        h_sc[...] = h0_ref[...]
        c_sc[...] = c0_ref[...]

    # Hoisted, MXU-sized input projection for the whole time block; the bias is
    # added once here instead of being re-broadcast every time step.
    xp_sc[...] = (jnp.dot(x_ref[...], w_ih_ref[...],
                          preferred_element_type=jnp.float32) + b_ref[...])

    w_hh = w_hh_ref[...]
    h_t = h_sc[...]
    c_t = c_sc[...]
    guard = (seq_len % Tb) != 0          # only the last block can be ragged
    t0 = ti * Tb

    # Fully unrolled (Tb is a small static tile) -> straight-line code, state
    # carried in registers, only h_prev @ W_hh left on the serial chain.
    for t in range(Tb):
        h_prev, c_prev = h_t, c_t
        gates = xp_sc[t * Np:(t + 1) * Np, :] + jnp.dot(
            h_prev, w_hh, preferred_element_type=jnp.float32)
        # Each gate owns its own Hp (=multiple of 128) slot -> lane-aligned.
        i_g = jax.nn.sigmoid(gates[:, 0:Hp])
        f_g = jax.nn.sigmoid(gates[:, Hp:2 * Hp])
        g_g = jnp.tanh(gates[:, 2 * Hp:3 * Hp])
        o_g = jax.nn.sigmoid(gates[:, 3 * Hp:4 * Hp])
        c_t = f_g * c_prev + i_g * g_g
        h_t = o_g * jnp.tanh(c_t)
        if guard:
            valid = (t0 + t) < seq_len
            h_t = jnp.where(valid, h_t, h_prev)
            c_t = jnp.where(valid, c_t, c_prev)
        h_all_ref[t * Np:(t + 1) * Np, :] = h_t

    h_sc[...] = h_t
    c_sc[...] = c_t
    hn_ref[...] = h_t
    cn_ref[...] = c_t


# ----------------------------------------------------------------------------
# Pass 2: 1x1 conv (matmul) + masked log_softmax, lane-dense output.
# ----------------------------------------------------------------------------
def conv_logsoftmax_kernel(h_ref, w_ref, b_ref, out_ref, *, out_size):
    logits = (jnp.dot(h_ref[...], w_ref[...],
                      preferred_element_type=jnp.float32) + b_ref[...])
    o_pad = logits.shape[-1]
    if out_size != o_pad:
        lane = lax.broadcasted_iota(jnp.int32, logits.shape, 1)
        logits = jnp.where(lane < out_size, logits, jnp.float32(-1e30))
    m = jnp.max(logits, axis=-1, keepdims=True)
    s = logits - m
    denom = jnp.sum(jnp.exp(s), axis=-1, keepdims=True)
    out_ref[...] = (s - jnp.log(denom)).astype(out_ref.dtype)


# ----------------------------------------------------------------------------
# Parameters.
# ----------------------------------------------------------------------------
def init_decoder_params(key, encoder_size, hidden_size, out_size):
    """Deterministic init mimicking PyTorch scales (uniform +-1/sqrt(fan))."""
    E, H, O = encoder_size, hidden_size, out_size
    k_lstm = 1.0 / (H ** 0.5)
    k_conv = 1.0 / (H ** 0.5)            # conv fan_in = H * 1 * 1
    ks = jax.random.split(key, 6)
    w_ih = jax.random.uniform(ks[0], (E, 4 * H), jnp.float32, -k_lstm, k_lstm)
    w_hh = jax.random.uniform(ks[1], (H, 4 * H), jnp.float32, -k_lstm, k_lstm)
    b_ih = jax.random.uniform(ks[2], (1, 4 * H), jnp.float32, -k_lstm, k_lstm)
    b_hh = jax.random.uniform(ks[3], (1, 4 * H), jnp.float32, -k_lstm, k_lstm)
    w_conv = jax.random.uniform(ks[4], (H, O), jnp.float32, -k_conv, k_conv)
    b_conv = jax.random.uniform(ks[5], (1, O), jnp.float32, -k_conv, k_conv)
    return {
        "w_ih": w_ih, "w_hh": w_hh,
        "b": b_ih + b_hh,          # LSTM adds both biases; fold once here
        "w_conv": w_conv, "b_conv": b_conv,
    }


def _pad_params(params, H, Hp, O, Op):
    """Pad to the kernel layout: per-gate Hp-aligned columns, Hp/Op padding."""
    def pad_gate_cols(w):
        lead = w.shape[:-1]
        w4 = w.reshape(lead + (4, H))
        pad = [(0, 0)] * (len(lead) + 1) + [(0, Hp - H)]
        return jnp.pad(w4, pad).reshape(lead + (4 * Hp,))

    w_ih = pad_gate_cols(params["w_ih"])                          # (E, 4Hp)
    w_hh = pad_gate_cols(params["w_hh"])                          # (H, 4Hp)
    w_hh = jnp.pad(w_hh, ((0, Hp - H), (0, 0)))                   # (Hp, 4Hp)
    b = pad_gate_cols(params["b"])                                # (1, 4Hp)
    w_conv = jnp.pad(params["w_conv"], ((0, Hp - H), (0, Op - O)))  # (Hp, Op)
    b_conv = jnp.pad(params["b_conv"], ((0, 0), (0, Op - O)))       # (1, Op)
    return w_ih, w_hh, b, w_conv, b_conv


# ----------------------------------------------------------------------------
# Forward (equivalent of Decoder.forward).
# ----------------------------------------------------------------------------
def decoder_forward(x, params, h=None, *, t_block=8):
    """x: (N, encoder_size, T); h: optional (h0, c0), each (1, N, H).

    Returns (out, (h_n, c_n)):
      out: (N, out_size, T)  (or (N, out_size) if T == 1, like torch.squeeze)
      h_n, c_n: (1, N, H)
    """
    N, E, T = x.shape
    H = params["w_hh"].shape[0]
    O = params["w_conv"].shape[1]

    Np = _round_up(max(N, 8), 8)          # sublane-aligned batch
    Hp = _round_up(H, 128)                # lane-aligned gate slots
    Op = _round_up(O, 128)                # lane-dense output
    Tb = max(1, min(t_block, T))
    Tp = _round_up(T, Tb)
    n_tblk = Tp // Tb
    rows = Tp * Np
    G = 4 * Hp

    x = x.astype(jnp.float32)
    if h is None:
        h0 = jnp.zeros((Np, Hp), jnp.float32)
        c0 = jnp.zeros((Np, Hp), jnp.float32)
    else:
        h0 = jnp.zeros((Np, Hp), jnp.float32).at[:N, :H].set(
            jnp.asarray(h[0], jnp.float32).reshape(N, H))
        c0 = jnp.zeros((Np, Hp), jnp.float32).at[:N, :H].set(
            jnp.asarray(h[1], jnp.float32).reshape(N, H))

    # (N, E, T) -> time-major (Tp, Np, E) -> 2D row-major (Tp*Np, E)
    x_tme = jnp.transpose(x, (2, 0, 1))
    x_tme = jnp.pad(x_tme, ((0, Tp - T), (0, Np - N), (0, 0)))
    x2d = x_tme.reshape(rows, E)

    w_ih, w_hh, b, w_conv, b_conv = _pad_params(params, H, Hp, O, Op)

    # ---- Pass 1: LSTM recurrence (serial over T, pipelined over time blocks).
    lstm = functools.partial(lstm_block_kernel, hidden_pad=Hp, t_block=Tb,
                             n_pad=Np, seq_len=T)
    h_all, h_n, c_n = pl.pallas_call(
        lstm,
        grid=(n_tblk,),
        in_specs=[
            pl.BlockSpec((Tb * Np, E), lambda i: (i, 0)),   # x block
            pl.BlockSpec((Np, Hp), lambda i: (0, 0)),       # h0
            pl.BlockSpec((Np, Hp), lambda i: (0, 0)),       # c0
            pl.BlockSpec((E, G), lambda i: (0, 0)),         # w_ih
            pl.BlockSpec((Hp, G), lambda i: (0, 0)),        # w_hh
            pl.BlockSpec((1, G), lambda i: (0, 0)),         # b
        ],
        out_specs=(
            pl.BlockSpec((Tb * Np, Hp), lambda i: (i, 0)),  # h_all block
            pl.BlockSpec((Np, Hp), lambda i: (0, 0)),       # h_n (resident)
            pl.BlockSpec((Np, Hp), lambda i: (0, 0)),       # c_n (resident)
        ),
        out_shape=(
            jax.ShapeDtypeStruct((rows, Hp), jnp.float32),
            jax.ShapeDtypeStruct((Np, Hp), jnp.float32),
            jax.ShapeDtypeStruct((Np, Hp), jnp.float32),
        ),
        scratch_shapes=[
            pltpu.VMEM((Tb * Np, G), jnp.float32),   # X@W_ih + b for the block
            pltpu.VMEM((Np, Hp), jnp.float32),       # h carry across blocks
            pltpu.VMEM((Np, Hp), jnp.float32),       # c carry across blocks
        ],
        compiler_params=pltpu.CompilerParams(
            dimension_semantics=("arbitrary",),       # recurrence is serial
            vmem_limit_bytes=48 * 1024 * 1024),       # fits v7x's 64 MiB VMEM
    )(x2d, h0, c0, w_ih, w_hh, b)

    # ---- Pass 2: 1x1 conv + log_softmax (embarrassingly parallel over rows).
    conv = functools.partial(conv_logsoftmax_kernel, out_size=O)
    row_blk = Tb * Np
    out2d = pl.pallas_call(
        conv,
        grid=(rows // row_blk,),
        in_specs=[
            pl.BlockSpec((row_blk, Hp), lambda i: (i, 0)),
            pl.BlockSpec((Hp, Op), lambda i: (0, 0)),
            pl.BlockSpec((1, Op), lambda i: (0, 0)),
        ],
        out_specs=pl.BlockSpec((row_blk, Op), lambda i: (i, 0)),
        out_shape=jax.ShapeDtypeStruct((rows, Op), jnp.float32),
        compiler_params=pltpu.CompilerParams(
            dimension_semantics=("parallel",),        # megacore / 2-TC on v7x
            vmem_limit_bytes=48 * 1024 * 1024),
    )(h_all, w_conv, b_conv)

    out = out2d.reshape(Tp, Np, Op)[:T, :N, :O]
    out = jnp.transpose(out, (1, 2, 0))               # (N, O, T)
    if T == 1:
        out = out[:, :, 0]   # torch.squeeze(out, dim=2) only fires when T == 1
    h_n = h_n[:N, :H].reshape(1, N, H)
    c_n = c_n[:N, :H].reshape(1, N, H)
    return out, (h_n, c_n)


# ----------------------------------------------------------------------------
# Plain-JAX reference for a correctness check.
# ----------------------------------------------------------------------------
def decoder_reference(x, params, h=None):
    N, E, T = x.shape
    H = params["w_hh"].shape[0]
    hp = lax.Precision.HIGHEST
    if h is None:
        h0 = jnp.zeros((N, H), jnp.float32)
        c0 = jnp.zeros((N, H), jnp.float32)
    else:
        h0 = jnp.asarray(h[0], jnp.float32).reshape(N, H)
        c0 = jnp.asarray(h[1], jnp.float32).reshape(N, H)
    x_t = jnp.transpose(x.astype(jnp.float32), (2, 0, 1))   # (T, N, E)

    def step(carry, xt):
        h_prev, c_prev = carry
        gates = (jnp.dot(xt, params["w_ih"], precision=hp)
                 + jnp.dot(h_prev, params["w_hh"], precision=hp) + params["b"])
        i = jax.nn.sigmoid(gates[:, :H])
        f = jax.nn.sigmoid(gates[:, H:2 * H])
        g = jnp.tanh(gates[:, 2 * H:3 * H])
        o = jax.nn.sigmoid(gates[:, 3 * H:4 * H])
        c = f * c_prev + i * g
        hh = o * jnp.tanh(c)
        return (hh, c), hh

    (hn, cn), hs = lax.scan(step, (h0, c0), x_t)
    logits = jnp.dot(hs, params["w_conv"], precision=hp) + params["b_conv"]
    out = jax.nn.log_softmax(logits, axis=-1)                # (T, N, O)
    out = jnp.transpose(out, (1, 2, 0))                      # (N, O, T)
    if T == 1:
        out = out[:, :, 0]
    return out, (hn, cn)


if __name__ == "__main__":
    # Small, module-consistent shapes: x is (batch, encoder_size, seq_len).
    N, E, H, O, T = 2, 8, 16, 8, 16

    key = jax.random.PRNGKey(0)
    k_param, k_x = jax.random.split(key)
    params = init_decoder_params(k_param, E, H, O)
    x = jax.random.normal(k_x, (N, E, T), dtype=jnp.float32)

    out, (h_n, c_n) = decoder_forward(x, params, h=None)
    jax.block_until_ready((out, h_n, c_n))

    assert out.shape == (N, O, T)
    assert h_n.shape == (1, N, H) and c_n.shape == (1, N, H)
    # log_softmax sanity: probs along channel dim sum to 1.
    assert bool(jnp.allclose(jnp.sum(jnp.exp(out), axis=1), 1.0, atol=1e-4))

    # Reference check against a plain-JAX LSTM + conv + log_softmax.
    ref_out, (ref_hn, ref_cn) = decoder_reference(x, params, h=None)
    assert bool(jnp.allclose(out, ref_out, atol=2e-3, rtol=2e-3))
    assert bool(jnp.allclose(h_n[0], ref_hn, atol=2e-3, rtol=2e-3))
    assert bool(jnp.allclose(c_n[0], ref_cn, atol=2e-3, rtol=2e-3))

    print("KERNEL_OK")
</pallas_src>

<mosaic_0001>
module attributes {stable_mosaic.version = 11 : i64} {
  func.func @lstm_block_kernel(%arg0: i32, %arg1: memref<64x8xf32, #tpu.memory_space<vmem>>, %arg2: memref<8x128xf32, #tpu.memory_space<vmem>>, %arg3: memref<8x128xf32, #tpu.memory_space<vmem>>, %arg4: memref<8x512xf32, #tpu.memory_space<vmem>>, %arg5: memref<128x512xf32, #tpu.memory_space<vmem>>, %arg6: memref<1x512xf32, #tpu.memory_space<vmem>>, %arg7: memref<64x128xf32, #tpu.memory_space<vmem>>, %arg8: memref<8x128xf32, #tpu.memory_space<vmem>>, %arg9: memref<8x128xf32, #tpu.memory_space<vmem>>, %arg10: memref<64x512xf32, #tpu.memory_space<vmem>>, %arg11: memref<8x128xf32, #tpu.memory_space<vmem>>, %arg12: memref<8x128xf32, #tpu.memory_space<vmem>>) attributes {dimension_semantics = [#tpu.dimension_semantics<arbitrary>], iteration_bounds = array<i64: 2>, scalar_prefetch = 0 : i64, scratch_operands = 3 : i64, tpu.core_type = #tpu.core_type<tc>, window_params = [{transform_indices = @transform_0, window_bounds = array<i64: 64, 8>}, {pipeline_mode = #tpu.pipeline_mode<synchronous>, transform_indices = @transform_1, window_bounds = array<i64: 8, 128>}, {pipeline_mode = #tpu.pipeline_mode<synchronous>, transform_indices = @transform_2, window_bounds = array<i64: 8, 128>}, {pipeline_mode = #tpu.pipeline_mode<synchronous>, transform_indices = @transform_3, window_bounds = array<i64: 8, 512>}, {pipeline_mode = #tpu.pipeline_mode<synchronous>, transform_indices = @transform_4, window_bounds = array<i64: 128, 512>}, {pipeline_mode = #tpu.pipeline_mode<synchronous>, transform_indices = @transform_5, window_bounds = array<i64: 1, 512>}, {transform_indices = @transform_6, window_bounds = array<i64: 64, 128>}, {pipeline_mode = #tpu.pipeline_mode<synchronous>, transform_indices = @transform_7, window_bounds = array<i64: 8, 128>}, {pipeline_mode = #tpu.pipeline_mode<synchronous>, transform_indices = @transform_8, window_bounds = array<i64: 8, 128>}]} {
    %c0_i32 = arith.constant 0 : i32
    %0 = arith.cmpi eq, %arg0, %c0_i32 : i32
    %1 = arith.extui %0 : i1 to i32
    %c0_i32_0 = arith.constant 0 : i32
    %2 = arith.cmpi ne, %1, %c0_i32_0 : i32
    scf.if %2 {
      %c0_79 = arith.constant 0 : index
      %c0_80 = arith.constant 0 : index
      %249 = vector.load %arg2[%c0_79, %c0_80] : memref<8x128xf32, #tpu.memory_space<vmem>>, vector<8x128xf32>
      %c0_81 = arith.constant 0 : index
      %c0_82 = arith.constant 0 : index
      %250 = vector.load %arg11[%c0_81, %c0_82] : memref<8x128xf32, #tpu.memory_space<vmem>>, vector<8x128xf32>
      tpu.vector_store %arg11[%c0_81, %c0_82], %249 {strides = array<i32>} : memref<8x128xf32, #tpu.memory_space<vmem>>, vector<8x128xf32>,
      %c0_83 = arith.constant 0 : index
      %c0_84 = arith.constant 0 : index
      %251 = vector.load %arg3[%c0_83, %c0_84] : memref<8x128xf32, #tpu.memory_space<vmem>>, vector<8x128xf32>
      %c0_85 = arith.constant 0 : index
      %c0_86 = arith.constant 0 : index
      %252 = vector.load %arg12[%c0_85, %c0_86] : memref<8x128xf32, #tpu.memory_space<vmem>>, vector<8x128xf32>
      tpu.vector_store %arg12[%c0_85, %c0_86], %251 {strides = array<i32>} : memref<8x128xf32, #tpu.memory_space<vmem>>, vector<8x128xf32>,
    } else {
    }
    %c0 = arith.constant 0 : index
    %c0_1 = arith.constant 0 : index
    %3 = vector.load %arg1[%c0, %c0_1] : memref<64x8xf32, #tpu.memory_space<vmem>>, vector<64x8xf32>
    %c0_2 = arith.constant 0 : index
    %c0_3 = arith.constant 0 : index
    %4 = vector.load %arg4[%c0_2, %c0_3] : memref<8x512xf32, #tpu.memory_space<vmem>>, vector<8x512xf32>
    %cst = arith.constant dense<0.000000e+00> : vector<64x512xf32>
    %5 = tpu.matmul %3, %4, %cst {dimension_numbers = #tpu.dot_dimension_numbers<[1], [0], [0], [1], [0, 0, 1, 1], [], []>} : vector<64x8xf32>, vector<8x512xf32>, vector<64x512xf32> -> vector<64x512xf32>
    %c0_4 = arith.constant 0 : index
    %c0_5 = arith.constant 0 : index
    %6 = vector.load %arg6[%c0_4, %c0_5] : memref<1x512xf32, #tpu.memory_space<vmem>>, vector<1x512xf32>
    %7 = vector.broadcast %6 : vector<1x512xf32> to vector<64x512xf32>
    %8 = arith.addf %5, %7 : vector<64x512xf32>
    %c0_6 = arith.constant 0 : index
    %c0_7 = arith.constant 0 : index
    %9 = vector.load %arg10[%c0_6, %c0_7] : memref<64x512xf32, #tpu.memory_space<vmem>>, vector<64x512xf32>
    tpu.vector_store %arg10[%c0_6, %c0_7], %8 {strides = array<i32>} : memref<64x512xf32, #tpu.memory_space<vmem>>, vector<64x512xf32>,
    %c0_8 = arith.constant 0 : index
    %c0_9 = arith.constant 0 : index
    %10 = vector.load %arg5[%c0_8, %c0_9] : memref<128x512xf32, #tpu.memory_space<vmem>>, vector<128x512xf32>
    %c0_10 = arith.constant 0 : index
    %c0_11 = arith.constant 0 : index
    %11 = vector.load %arg11[%c0_10, %c0_11] : memref<8x128xf32, #tpu.memory_space<vmem>>, vector<8x128xf32>
    %c0_12 = arith.constant 0 : index
    %c0_13 = arith.constant 0 : index
    %12 = vector.load %arg12[%c0_12, %c0_13] : memref<8x128xf32, #tpu.memory_space<vmem>>, vector<8x128xf32>
    %c0_14 = arith.constant 0 : index
    %c0_15 = arith.constant 0 : index
    %13 = vector.load %arg10[%c0_14, %c0_15] : memref<64x512xf32, #tpu.memory_space<vmem>>, vector<8x512xf32>
    %cst_16 = arith.constant dense<0.000000e+00> : vector<8x512xf32>
    %14 = tpu.matmul %11, %10, %cst_16 {dimension_numbers = #tpu.dot_dimension_numbers<[1], [0], [0], [1], [0, 0, 1, 1], [], []>} : vector<8x128xf32>, vector<128x512xf32>, vector<8x512xf32> -> vector<8x512xf32>
    %15 = arith.addf %13, %14 : vector<8x512xf32>
    %16 = vector.extract_strided_slice %15 {offsets = [0, 0], sizes = [8, 128], strides = [1, 1]} : vector<8x512xf32> to vector<8x128xf32>
    %17 = arith.negf %16 : vector<8x128xf32>
    %18 = math.exp %17 : vector<8x128xf32>
    %cst_17 = arith.constant 1.000000e+00 : f32
    %19 = vector.broadcast %cst_17 : f32 to vector<8x128xf32>
    %20 = arith.addf %19, %18 : vector<8x128xf32>
    %21 = arith.divf %19, %20 : vector<8x128xf32>
    %22 = vector.extract_strided_slice %15 {offsets = [0, 128], sizes = [8, 128], strides = [1, 1]} : vector<8x512xf32> to vector<8x128xf32>
    %23 = arith.negf %22 : vector<8x128xf32>
    %24 = math.exp %23 : vector<8x128xf32>
    %cst_18 = arith.constant 1.000000e+00 : f32
    %25 = vector.broadcast %cst_18 : f32 to vector<8x128xf32>
    %26 = arith.addf %25, %24 : vector<8x128xf32>
    %27 = arith.divf %25, %26 : vector<8x128xf32>
    %28 = vector.extract_strided_slice %15 {offsets = [0, 256], sizes = [8, 128], strides = [1, 1]} : vector<8x512xf32> to vector<8x128xf32>
    %29 = math.tanh %28 : vector<8x128xf32>
    %30 = vector.extract_strided_slice %15 {offsets = [0, 384], sizes = [8, 128], strides = [1, 1]} : vector<8x512xf32> to vector<8x128xf32>
    %31 = arith.negf %30 : vector<8x128xf32>
    %32 = math.exp %31 : vector<8x128xf32>
    %cst_19 = arith.constant 1.000000e+00 : f32
    %33 = vector.broadcast %cst_19 : f32 to vector<8x128xf32>
    %34 = arith.addf %33, %32 : vector<8x128xf32>
    %35 = arith.divf %33, %34 : vector<8x128xf32>
    %36 = arith.mulf %27, %12 : vector<8x128xf32>
    %37 = arith.mulf %21, %29 : vector<8x128xf32>
    %38 = arith.addf %36, %37 : vector<8x128xf32>
    %39 = math.tanh %38 : vector<8x128xf32>
    %40 = arith.mulf %35, %39 : vector<8x128xf32>
    %c0_20 = arith.constant 0 : index
    %c0_21 = arith.constant 0 : index
    %41 = vector.load %arg7[%c0_20, %c0_21] : memref<64x128xf32, #tpu.memory_space<vmem>>, vector<8x128xf32>
    tpu.vector_store %arg7[%c0_20, %c0_21], %40 {strides = array<i32>} : memref<64x128xf32, #tpu.memory_space<vmem>>, vector<8x128xf32>,
    %c8 = arith.constant 8 : index
    %c0_22 = arith.constant 0 : index
    %42 = vector.load %arg10[%c8, %c0_22] : memref<64x512xf32, #tpu.memory_space<vmem>>, vector<8x512xf32>
    %cst_23 = arith.constant dense<0.000000e+00> : vector<8x512xf32>
    %43 = tpu.matmul %40, %10, %cst_23 {dimension_numbers = #tpu.dot_dimension_numbers<[1], [0], [0], [1], [0, 0, 1, 1], [], []>} : vector<8x128xf32>, vector<128x512xf32>, vector<8x512xf32> -> vector<8x512xf32>
    %44 = arith.addf %42, %43 : vector<8x512xf32>
    %45 = vector.extract_strided_slice %44 {offsets = [0, 0], sizes = [8, 128], strides = [1, 1]} : vector<8x512xf32> to vector<8x128xf32>
    %46 = arith.negf %45 : vector<8x128xf32>
    %47 = math.exp %46 : vector<8x128xf32>
    %cst_24 = arith.constant 1.000000e+00 : f32
    %48 = vector.broadcast %cst_24 : f32 to vector<8x128xf32>
    %49 = arith.addf %48, %47 : vector<8x128xf32>
    %50 = arith.divf %48, %49 : vector<8x128xf32>
    %51 = vector.extract_strided_slice %44 {offsets = [0, 128], sizes = [8, 128], strides = [1, 1]} : vector<8x512xf32> to vector<8x128xf32>
    %52 = arith.negf %51 : vector<8x128xf32>
    %53 = math.exp %52 : vector<8x128xf32>
    %cst_25 = arith.constant 1.000000e+00 : f32
    %54 = vector.broadcast %cst_25 : f32 to vector<8x128xf32>
    %55 = arith.addf %54, %53 : vector<8x128xf32>
    %56 = arith.divf %54, %55 : vector<8x128xf32>
    %57 = vector.extract_strided_slice %44 {offsets = [0, 256], sizes = [8, 128], strides = [1, 1]} : vector<8x512xf32> to vector<8x128xf32>
    %58 = math.tanh %57 : vector<8x128xf32>
    %59 = vector.extract_strided_slice %44 {offsets = [0, 384], sizes = [8, 128], strides = [1, 1]} : vector<8x512xf32> to vector<8x128xf32>
    %60 = arith.negf %59 : vector<8x128xf32>
    %61 = math.exp %60 : vector<8x128xf32>
    %cst_26 = arith.constant 1.000000e+00 : f32
    %62 = vector.broadcast %cst_26 : f32 to vector<8x128xf32>
    %63 = arith.addf %62, %61 : vector<8x128xf32>
    %64 = arith.divf %62, %63 : vector<8x128xf32>
    %65 = arith.mulf %56, %38 : vector<8x128xf32>
    %66 = arith.mulf %50, %58 : vector<8x128xf32>
    %67 = arith.addf %65, %66 : vector<8x128xf32>
    %68 = math.tanh %67 : vector<8x128xf32>
    %69 = arith.mulf %64, %68 : vector<8x128xf32>
    %c8_27 = arith.constant 8 : index
    %c0_28 = arith.constant 0 : index
    %70 = vector.load %arg7[%c8_27, %c0_28] : memref<64x128xf32, #tpu.memory_space<vmem>>, vector<8x128xf32>
    tpu.vector_store %arg7[%c8_27, %c0_28], %69 {strides = array<i32>} : memref<64x128xf32, #tpu.memory_space<vmem>>, vector<8x128xf32>,
    %c16 = arith.constant 16 : index
    %c0_29 = arith.constant 0 : index
    %71 = vector.load %arg10[%c16, %c0_29] : memref<64x512xf32, #tpu.memory_space<vmem>>, vector<8x512xf32>
    %cst_30 = arith.constant dense<0.000000e+00> : vector<8x512xf32>
    %72 = tpu.matmul %69, %10, %cst_30 {dimension_numbers = #tpu.dot_dimension_numbers<[1], [0], [0], [1], [0, 0, 1, 1], [], []>} : vector<8x128xf32>, vector<128x512xf32>, vector<8x512xf32> -> vector<8x512xf32>
    %73 = arith.addf %71, %72 : vector<8x512xf32>
    %74 = vector.extract_strided_slice %73 {offsets = [0, 0], sizes = [8, 128], strides = [1, 1]} : vector<8x512xf32> to vector<8x128xf32>
    %75 = arith.negf %74 : vector<8x128xf32>
    %76 = math.exp %75 : vector<8x128xf32>
    %cst_31 = arith.constant 1.000000e+00 : f32
    %77 = vector.broadcast %cst_31 : f32 to vector<8x128xf32>
    %78 = arith.addf %77, %76 : vector<8x128xf32>
    %79 = arith.divf %77, %78 : vector<8x128xf32>
    %80 = vector.extract_strided_slice %73 {offsets = [0, 128], sizes = [8, 128], strides = [1, 1]} : vector<8x512xf32> to vector<8x128xf32>
    %81 = arith.negf %80 : vector<8x128xf32>
    %82 = math.exp %81 : vector<8x128xf32>
    %cst_32 = arith.constant 1.000000e+00 : f32
    %83 = vector.broadcast %cst_32 : f32 to vector<8x128xf32>
    %84 = arith.addf %83, %82 : vector<8x128xf32>
    %85 = arith.divf %83, %84 : vector<8x128xf32>
    %86 = vector.extract_strided_slice %73 {offsets = [0, 256], sizes = [8, 128], strides = [1, 1]} : vector<8x512xf32> to vector<8x128xf32>
    %87 = math.tanh %86 : vector<8x128xf32>
    %88 = vector.extract_strided_slice %73 {offsets = [0, 384], sizes = [8, 128], strides = [1, 1]} : vector<8x512xf32> to vector<8x128xf32>
    %89 = arith.negf %88 : vector<8x128xf32>
    %90 = math.exp %89 : vector<8x128xf32>
    %cst_33 = arith.constant 1.000000e+00 : f32
    %91 = vector.broadcast %cst_33 : f32 to vector<8x128xf32>
    %92 = arith.addf %91, %90 : vector<8x128xf32>
    %93 = arith.divf %91, %92 : vector<8x128xf32>
    %94 = arith.mulf %85, %67 : vector<8x128xf32>
    %95 = arith.mulf %79, %87 : vector<8x128xf32>
    %96 = arith.addf %94, %95 : vector<8x128xf32>
    %97 = math.tanh %96 : vector<8x128xf32>
    %98 = arith.mulf %93, %97 : vector<8x128xf32>
    %c16_34 = arith.constant 16 : index
    %c0_35 = arith.constant 0 : index
    %99 = vector.load %arg7[%c16_34, %c0_35] : memref<64x128xf32, #tpu.memory_space<vmem>>, vector<8x128xf32>
    tpu.vector_store %arg7[%c16_34, %c0_35], %98 {strides = array<i32>} : memref<64x128xf32, #tpu.memory_space<vmem>>, vector<8x128xf32>,
    %c24 = arith.constant 24 : index
    %c0_36 = arith.constant 0 : index
    %100 = vector.load %arg10[%c24, %c0_36] : memref<64x512xf32, #tpu.memory_space<vmem>>, vector<8x512xf32>
    %cst_37 = arith.constant dense<0.000000e+00> : vector<8x512xf32>
    %101 = tpu.matmul %98, %10, %cst_37 {dimension_numbers = #tpu.dot_dimension_numbers<[1], [0], [0], [1], [0, 0, 1, 1], [], []>} : vector<8x128xf32>, vector<128x512xf32>, vector<8x512xf32> -> vector<8x512xf32>
    %102 = arith.addf %100, %101 : vector<8x512xf32>
    %103 = vector.extract_strided_slice %102 {offsets = [0, 0], sizes = [8, 128], strides = [1, 1]} : vector<8x512xf32> to vector<8x128xf32>
    %104 = arith.negf %103 : vector<8x128xf32>
    %105 = math.exp %104 : vector<8x128xf32>
    %cst_38 = arith.constant 1.000000e+00 : f32
    %106 = vector.broadcast %cst_38 : f32 to vector<8x128xf32>
    %107 = arith.addf %106, %105 : vector<8x128xf32>
    %108 = arith.divf %106, %107 : vector<8x128xf32>
    %109 = vector.extract_strided_slice %102 {offsets = [0, 128], sizes = [8, 128], strides = [1, 1]} : vector<8x512xf32> to vector<8x128xf32>
    %110 = arith.negf %109 : vector<8x128xf32>
    %111 = math.exp %110 : vector<8x128xf32>
    %cst_39 = arith.constant 1.000000e+00 : f32
    %112 = vector.broadcast %cst_39 : f32 to vector<8x128xf32>
    %113 = arith.addf %112, %111 : vector<8x128xf32>
    %114 = arith.divf %112, %113 : vector<8x128xf32>
    %115 = vector.extract_strided_slice %102 {offsets = [0, 256], sizes = [8, 128], strides = [1, 1]} : vector<8x512xf32> to vector<8x128xf32>
    %116 = math.tanh %115 : vector<8x128xf32>
    %117 = vector.extract_strided_slice %102 {offsets = [0, 384], sizes = [8, 128], strides = [1, 1]} : vector<8x512xf32> to vector<8x128xf32>
    %118 = arith.negf %117 : vector<8x128xf32>
    %119 = math.exp %118 : vector<8x128xf32>
    %cst_40 = arith.constant 1.000000e+00 : f32
    %120 = vector.broadcast %cst_40 : f32 to vector<8x128xf32>
    %121 = arith.addf %120, %119 : vector<8x128xf32>
    %122 = arith.divf %120, %121 : vector<8x128xf32>
    %123 = arith.mulf %114, %96 : vector<8x128xf32>
    %124 = arith.mulf %108, %116 : vector<8x128xf32>
    %125 = arith.addf %123, %124 : vector<8x128xf32>
    %126 = math.tanh %125 : vector<8x128xf32>
    %127 = arith.mulf %122, %126 : vector<8x128xf32>
    %c24_41 = arith.constant 24 : index
    %c0_42 = arith.constant 0 : index
    %128 = vector.load %arg7[%c24_41, %c0_42] : memref<64x128xf32, #tpu.memory_space<vmem>>, vector<8x128xf32>
    tpu.vector_store %arg7[%c24_41, %c0_42], %127 {strides = array<i32>} : memref<64x128xf32, #tpu.memory_space<vmem>>, vector<8x128xf32>,
    %c32 = arith.constant 32 : index
    %c0_43 = arith.constant 0 : index
    %129 = vector.load %arg10[%c32, %c0_43] : memref<64x512xf32, #tpu.memory_space<vmem>>, vector<8x512xf32>
    %cst_44 = arith.constant dense<0.000000e+00> : vector<8x512xf32>
    %130 = tpu.matmul %127, %10, %cst_44 {dimension_numbers = #tpu.dot_dimension_numbers<[1], [0], [0], [1], [0, 0, 1, 1], [], []>} : vector<8x128xf32>, vector<128x512xf32>, vector<8x512xf32> -> vector<8x512xf32>
    %131 = arith.addf %129, %130 : vector<8x512xf32>
    %132 = vector.extract_strided_slice %131 {offsets = [0, 0], sizes = [8, 128], strides = [1, 1]} : vector<8x512xf32> to vector<8x128xf32>
    %133 = arith.negf %132 : vector<8x128xf32>
    %134 = math.exp %133 : vector<8x128xf32>
    %cst_45 = arith.constant 1.000000e+00 : f32
    %135 = vector.broadcast %cst_45 : f32 to vector<8x128xf32>
    %136 = arith.addf %135, %134 : vector<8x128xf32>
    %137 = arith.divf %135, %136 : vector<8x128xf32>
    %138 = vector.extract_strided_slice %131 {offsets = [0, 128], sizes = [8, 128], strides = [1, 1]} : vector<8x512xf32> to vector<8x128xf32>
    %139 = arith.negf %138 : vector<8x128xf32>
    %140 = math.exp %139 : vector<8x128xf32>
    %cst_46 = arith.constant 1.000000e+00 : f32
    %141 = vector.broadcast %cst_46 : f32 to vector<8x128xf32>
    %142 = arith.addf %141, %140 : vector<8x128xf32>
    %143 = arith.divf %141, %142 : vector<8x128xf32>
    %144 = vector.extract_strided_slice %131 {offsets = [0, 256], sizes = [8, 128], strides = [1, 1]} : vector<8x512xf32> to vector<8x128xf32>
    %145 = math.tanh %144 : vector<8x128xf32>
    %146 = vector.extract_strided_slice %131 {offsets = [0, 384], sizes = [8, 128], strides = [1, 1]} : vector<8x512xf32> to vector<8x128xf32>
    %147 = arith.negf %146 : vector<8x128xf32>
    %148 = math.exp %147 : vector<8x128xf32>
    %cst_47 = arith.constant 1.000000e+00 : f32
    %149 = vector.broadcast %cst_47 : f32 to vector<8x128xf32>
    %150 = arith.addf %149, %148 : vector<8x128xf32>
    %151 = arith.divf %149, %150 : vector<8x128xf32>
    %152 = arith.mulf %143, %125 : vector<8x128xf32>
    %153 = arith.mulf %137, %145 : vector<8x128xf32>
    %154 = arith.addf %152, %153 : vector<8x128xf32>
    %155 = math.tanh %154 : vector<8x128xf32>
    %156 = arith.mulf %151, %155 : vector<8x128xf32>
    %c32_48 = arith.constant 32 : index
    %c0_49 = arith.constant 0 : index
    %157 = vector.load %arg7[%c32_48, %c0_49] : memref<64x128xf32, #tpu.memory_space<vmem>>, vector<8x128xf32>
    tpu.vector_store %arg7[%c32_48, %c0_49], %156 {strides = array<i32>} : memref<64x128xf32, #tpu.memory_space<vmem>>, vector<8x128xf32>,
    %c40 = arith.constant 40 : index
    %c0_50 = arith.constant 0 : index
    %158 = vector.load %arg10[%c40, %c0_50] : memref<64x512xf32, #tpu.memory_space<vmem>>, vector<8x512xf32>
    %cst_51 = arith.constant dense<0.000000e+00> : vector<8x512xf32>
    %159 = tpu.matmul %156, %10, %cst_51 {dimension_numbers = #tpu.dot_dimension_numbers<[1], [0], [0], [1], [0, 0, 1, 1], [], []>} : vector<8x128xf32>, vector<128x512xf32>, vector<8x512xf32> -> vector<8x512xf32>
    %160 = arith.addf %158, %159 : vector<8x512xf32>
    %161 = vector.extract_strided_slice %160 {offsets = [0, 0], sizes = [8, 128], strides = [1, 1]} : vector<8x512xf32> to vector<8x128xf32>
    %162 = arith.negf %161 : vector<8x128xf32>
    %163 = math.exp %162 : vector<8x128xf32>
    %cst_52 = arith.constant 1.000000e+00 : f32
    %164 = vector.broadcast %cst_52 : f32 to vector<8x128xf32>
    %165 = arith.addf %164, %163 : vector<8x128xf32>
    %166 = arith.divf %164, %165 : vector<8x128xf32>
    %167 = vector.extract_strided_slice %160 {offsets = [0, 128], sizes = [8, 128], strides = [1, 1]} : vector<8x512xf32> to vector<8x128xf32>
    %168 = arith.negf %167 : vector<8x128xf32>
    %169 = math.exp %168 : vector<8x128xf32>
    %cst_53 = arith.constant 1.000000e+00 : f32
    %170 = vector.broadcast %cst_53 : f32 to vector<8x128xf32>
    %171 = arith.addf %170, %169 : vector<8x128xf32>
    %172 = arith.divf %170, %171 : vector<8x128xf32>
    %173 = vector.extract_strided_slice %160 {offsets = [0, 256], sizes = [8, 128], strides = [1, 1]} : vector<8x512xf32> to vector<8x128xf32>
    %174 = math.tanh %173 : vector<8x128xf32>
    %175 = vector.extract_strided_slice %160 {offsets = [0, 384], sizes = [8, 128], strides = [1, 1]} : vector<8x512xf32> to vector<8x128xf32>
    %176 = arith.negf %175 : vector<8x128xf32>
    %177 = math.exp %176 : vector<8x128xf32>
    %cst_54 = arith.constant 1.000000e+00 : f32
    %178 = vector.broadcast %cst_54 : f32 to vector<8x128xf32>
    %179 = arith.addf %178, %177 : vector<8x128xf32>
    %180 = arith.divf %178, %179 : vector<8x128xf32>
    %181 = arith.mulf %172, %154 : vector<8x128xf32>
    %182 = arith.mulf %166, %174 : vector<8x128xf32>
    %183 = arith.addf %181, %182 : vector<8x128xf32>
    %184 = math.tanh %183 : vector<8x128xf32>
    %185 = arith.mulf %180, %184 : vector<8x128xf32>
    %c40_55 = arith.constant 40 : index
    %c0_56 = arith.constant 0 : index
    %186 = vector.load %arg7[%c40_55, %c0_56] : memref<64x128xf32, #tpu.memory_space<vmem>>, vector<8x128xf32>
    tpu.vector_store %arg7[%c40_55, %c0_56], %185 {strides = array<i32>} : memref<64x128xf32, #tpu.memory_space<vmem>>, vector<8x128xf32>,
    %c48 = arith.constant 48 : index
    %c0_57 = arith.constant 0 : index
    %187 = vector.load %arg10[%c48, %c0_57] : memref<64x512xf32, #tpu.memory_space<vmem>>, vector<8x512xf32>
    %cst_58 = arith.constant dense<0.000000e+00> : vector<8x512xf32>
    %188 = tpu.matmul %185, %10, %cst_58 {dimension_numbers = #tpu.dot_dimension_numbers<[1], [0], [0], [1], [0, 0, 1, 1], [], []>} : vector<8x128xf32>, vector<128x512xf32>, vector<8x512xf32> -> vector<8x512xf32>
    %189 = arith.addf %187, %188 : vector<8x512xf32>
    %190 = vector.extract_strided_slice %189 {offsets = [0, 0], sizes = [8, 128], strides = [1, 1]} : vector<8x512xf32> to vector<8x128xf32>
    %191 = arith.negf %190 : vector<8x128xf32>
    %192 = math.exp %191 : vector<8x128xf32>
    %cst_59 = arith.constant 1.000000e+00 : f32
    %193 = vector.broadcast %cst_59 : f32 to vector<8x128xf32>
    %194 = arith.addf %193, %192 : vector<8x128xf32>
    %195 = arith.divf %193, %194 : vector<8x128xf32>
    %196 = vector.extract_strided_slice %189 {offsets = [0, 128], sizes = [8, 128], strides = [1, 1]} : vector<8x512xf32> to vector<8x128xf32>
    %197 = arith.negf %196 : vector<8x128xf32>
    %198 = math.exp %197 : vector<8x128xf32>
    %cst_60 = arith.constant 1.000000e+00 : f32
    %199 = vector.broadcast %cst_60 : f32 to vector<8x128xf32>
    %200 = arith.addf %199, %198 : vector<8x128xf32>
    %201 = arith.divf %199, %200 : vector<8x128xf32>
    %202 = vector.extract_strided_slice %189 {offsets = [0, 256], sizes = [8, 128], strides = [1, 1]} : vector<8x512xf32> to vector<8x128xf32>
    %203 = math.tanh %202 : vector<8x128xf32>
    %204 = vector.extract_strided_slice %189 {offsets = [0, 384], sizes = [8, 128], strides = [1, 1]} : vector<8x512xf32> to vector<8x128xf32>
    %205 = arith.negf %204 : vector<8x128xf32>
    %206 = math.exp %205 : vector<8x128xf32>
    %cst_61 = arith.constant 1.000000e+00 : f32
    %207 = vector.broadcast %cst_61 : f32 to vector<8x128xf32>
    %208 = arith.addf %207, %206 : vector<8x128xf32>
    %209 = arith.divf %207, %208 : vector<8x128xf32>
    %210 = arith.mulf %201, %183 : vector<8x128xf32>
    %211 = arith.mulf %195, %203 : vector<8x128xf32>
    %212 = arith.addf %210, %211 : vector<8x128xf32>
    %213 = math.tanh %212 : vector<8x128xf32>
    %214 = arith.mulf %209, %213 : vector<8x128xf32>
    %c48_62 = arith.constant 48 : index
    %c0_63 = arith.constant 0 : index
    %215 = vector.load %arg7[%c48_62, %c0_63] : memref<64x128xf32, #tpu.memory_space<vmem>>, vector<8x128xf32>
    tpu.vector_store %arg7[%c48_62, %c0_63], %214 {strides = array<i32>} : memref<64x128xf32, #tpu.memory_space<vmem>>, vector<8x128xf32>,
    %c56 = arith.constant 56 : index
    %c0_64 = arith.constant 0 : index
    %216 = vector.load %arg10[%c56, %c0_64] : memref<64x512xf32, #tpu.memory_space<vmem>>, vector<8x512xf32>
    %cst_65 = arith.constant dense<0.000000e+00> : vector<8x512xf32>
    %217 = tpu.matmul %214, %10, %cst_65 {dimension_numbers = #tpu.dot_dimension_numbers<[1], [0], [0], [1], [0, 0, 1, 1], [], []>} : vector<8x128xf32>, vector<128x512xf32>, vector<8x512xf32> -> vector<8x512xf32>
    %218 = arith.addf %216, %217 : vector<8x512xf32>
    %219 = vector.extract_strided_slice %218 {offsets = [0, 0], sizes = [8, 128], strides = [1, 1]} : vector<8x512xf32> to vector<8x128xf32>
    %220 = arith.negf %219 : vector<8x128xf32>
    %221 = math.exp %220 : vector<8x128xf32>
    %cst_66 = arith.constant 1.000000e+00 : f32
    %222 = vector.broadcast %cst_66 : f32 to vector<8x128xf32>
    %223 = arith.addf %222, %221 : vector<8x128xf32>
    %224 = arith.divf %222, %223 : vector<8x128xf32>
    %225 = vector.extract_strided_slice %218 {offsets = [0, 128], sizes = [8, 128], strides = [1, 1]} : vector<8x512xf32> to vector<8x128xf32>
    %226 = arith.negf %225 : vector<8x128xf32>
    %227 = math.exp %226 : vector<8x128xf32>
    %cst_67 = arith.constant 1.000000e+00 : f32
    %228 = vector.broadcast %cst_67 : f32 to vector<8x128xf32>
    %229 = arith.addf %228, %227 : vector<8x128xf32>
    %230 = arith.divf %228, %229 : vector<8x128xf32>
    %231 = vector.extract_strided_slice %218 {offsets = [0, 256], sizes = [8, 128], strides = [1, 1]} : vector<8x512xf32> to vector<8x128xf32>
    %232 = math.tanh %231 : vector<8x128xf32>
    %233 = vector.extract_strided_slice %218 {offsets = [0, 384], sizes = [8, 128], strides = [1, 1]} : vector<8x512xf32> to vector<8x128xf32>
    %234 = arith.negf %233 : vector<8x128xf32>
    %235 = math.exp %234 : vector<8x128xf32>
    %cst_68 = arith.constant 1.000000e+00 : f32
    %236 = vector.broadcast %cst_68 : f32 to vector<8x128xf32>
    %237 = arith.addf %236, %235 : vector<8x128xf32>
    %238 = arith.divf %236, %237 : vector<8x128xf32>
    %239 = arith.mulf %230, %212 : vector<8x128xf32>
    %240 = arith.mulf %224, %232 : vector<8x128xf32>
    %241 = arith.addf %239, %240 : vector<8x128xf32>
    %242 = math.tanh %241 : vector<8x128xf32>
    %243 = arith.mulf %238, %242 : vector<8x128xf32>
    %c56_69 = arith.constant 56 : index
    %c0_70 = arith.constant 0 : index
    %244 = vector.load %arg7[%c56_69, %c0_70] : memref<64x128xf32, #tpu.memory_space<vmem>>, vector<8x128xf32>
    tpu.vector_store %arg7[%c56_69, %c0_70], %243 {strides = array<i32>} : memref<64x128xf32, #tpu.memory_space<vmem>>, vector<8x128xf32>,
    %c0_71 = arith.constant 0 : index
    %c0_72 = arith.constant 0 : index
    %245 = vector.load %arg11[%c0_71, %c0_72] : memref<8x128xf32, #tpu.memory_space<vmem>>, vector<8x128xf32>
    tpu.vector_store %arg11[%c0_71, %c0_72], %243 {strides = array<i32>} : memref<8x128xf32, #tpu.memory_space<vmem>>, vector<8x128xf32>,
    %c0_73 = arith.constant 0 : index
    %c0_74 = arith.constant 0 : index
    %246 = vector.load %arg12[%c0_73, %c0_74] : memref<8x128xf32, #tpu.memory_space<vmem>>, vector<8x128xf32>
    tpu.vector_store %arg12[%c0_73, %c0_74], %241 {strides = array<i32>} : memref<8x128xf32, #tpu.memory_space<vmem>>, vector<8x128xf32>,
    %c0_75 = arith.constant 0 : index
    %c0_76 = arith.constant 0 : index
    %247 = vector.load %arg8[%c0_75, %c0_76] : memref<8x128xf32, #tpu.memory_space<vmem>>, vector<8x128xf32>
    tpu.vector_store %arg8[%c0_75, %c0_76], %243 {strides = array<i32>} : memref<8x128xf32, #tpu.memory_space<vmem>>, vector<8x128xf32>,
    %c0_77 = arith.constant 0 : index
    %c0_78 = arith.constant 0 : index
    %248 = vector.load %arg9[%c0_77, %c0_78] : memref<8x128xf32, #tpu.memory_space<vmem>>, vector<8x128xf32>
    tpu.vector_store %arg9[%c0_77, %c0_78], %241 {strides = array<i32>} : memref<8x128xf32, #tpu.memory_space<vmem>>, vector<8x128xf32>,
    return
  }
  func.func @transform_0(%arg0: i32) -> (i32, i32) {
    %c0_i32 = arith.constant 0 : i32
    %c0_i32_0 = arith.constant 0 : i32
    return %arg0, %c0_i32 : i32, i32
  }
  func.func @transform_1(%arg0: i32) -> (i32, i32) {
    %c0_i32 = arith.constant 0 : i32
    %c0_i32_0 = arith.constant 0 : i32
    %c0_i32_1 = arith.constant 0 : i32
    return %c0_i32, %c0_i32_0 : i32, i32
  }
  func.func @transform_2(%arg0: i32) -> (i32, i32) {
    %c0_i32 = arith.constant 0 : i32
    %c0_i32_0 = arith.constant 0 : i32
    %c0_i32_1 = arith.constant 0 : i32
    return %c0_i32, %c0_i32_0 : i32, i32
  }
  func.func @transform_3(%arg0: i32) -> (i32, i32) {
    %c0_i32 = arith.constant 0 : i32
    %c0_i32_0 = arith.constant 0 : i32
    %c0_i32_1 = arith.constant 0 : i32
    return %c0_i32, %c0_i32_0 : i32, i32
  }
  func.func @transform_4(%arg0: i32) -> (i32, i32) {
    %c0_i32 = arith.constant 0 : i32
    %c0_i32_0 = arith.constant 0 : i32
    %c0_i32_1 = arith.constant 0 : i32
    return %c0_i32, %c0_i32_0 : i32, i32
  }
  func.func @transform_5(%arg0: i32) -> (i32, i32) {
    %c0_i32 = arith.constant 0 : i32
    %c0_i32_0 = arith.constant 0 : i32
    %c0_i32_1 = arith.constant 0 : i32
    return %c0_i32, %c0_i32_0 : i32, i32
  }
  func.func @transform_6(%arg0: i32) -> (i32, i32) {
    %c0_i32 = arith.constant 0 : i32
    %c0_i32_0 = arith.constant 0 : i32
    return %arg0, %c0_i32 : i32, i32
  }
  func.func @transform_7(%arg0: i32) -> (i32, i32) {
    %c0_i32 = arith.constant 0 : i32
    %c0_i32_0 = arith.constant 0 : i32
    %c0_i32_1 = arith.constant 0 : i32
    return %c0_i32, %c0_i32_0 : i32, i32
  }
  func.func @transform_8(%arg0: i32) -> (i32, i32) {
    %c0_i32 = arith.constant 0 : i32
    %c0_i32_0 = arith.constant 0 : i32
    %c0_i32_1 = arith.constant 0 : i32
    return %c0_i32, %c0_i32_0 : i32, i32
  }
}

</mosaic_0001>

<llo_original>
// kernel: tpu_custom_call.1
$region0: #{tpu_custom_call.1}
  #allocation0 [shape = 'u32[]', space=smem, size = 0x4, offset = 0x4, fixed_abs, tag = 'smem constant byte address 0x4 - core index']
  #allocation1 [shape = 'u32[144,128]{1,0:T(1,128)}', space=vmem, size = 0x12000, scoped, tag = 'internal scratch']
  #allocation2 [shape = 'f32[64,512]{1,0:T(8,128)}', space=vmem, size = 0x20000, scoped, tag = 'scratch operand']
  #allocation3 [shape = 'f32[8,128]{1,0:T(8,128)}', space=vmem, size = 0x1000, scoped, tag = 'scratch operand']
  #allocation4 [shape = 'f32[8,128]{1,0:T(8,128)}', space=vmem, size = 0x1000, scoped, tag = 'scratch operand']
  %s0 = inlined_call_operand.vmem [shape: f32[128,8], index: 0, kind: input, shape index: {}]
  %s1 = inlined_call_operand.vmem [shape: f32[8,128], index: 1, kind: input, shape index: {}]
  %s2 = inlined_call_operand.vmem [shape: f32[8,128], index: 2, kind: input, shape index: {}]
  %s3 = inlined_call_operand.vmem [shape: f32[8,512], index: 3, kind: input, shape index: {}]
  %s4 = inlined_call_operand.hbm [shape: f32[128,512], index: 4, kind: input, shape index: {}]
  %s5 = inlined_call_operand.vmem [shape: f32[1,512], index: 5, kind: input, shape index: {}]
  %s6 = inlined_call_operand.hbm [shape: f32[128,128], index: 6, kind: output, shape index: {0}]
  %s7 = inlined_call_operand.hbm [shape: f32[8,128], index: 7, kind: output, shape index: {1}]
  %s8 = inlined_call_operand.hbm [shape: f32[8,128], index: 8, kind: output, shape index: {2}]
  %9 = xla_tuple %s6, %s7, %s8
  %s10 = sld [smem:[#allocation0]]
  $region81: #{tpu_custom_call.1} parent=0
    _
  %s12 = ssub.s32 1, %s10
  %s13 = scalar_select 0, %s12, %s10
  $region1: #{tpu_custom_call.1} parent=0
    #allocation5 [shape = 'u8[262144]{0}', space=vmem, size = 0x40000, scoped, tag = 'input window, operand 4, single buffered']
    #allocation6 [shape = 's32[2]{0}', space=sflag, size = 0x8, scoped, tag = 'scoped memory for tpu_custom_call.1']
    #allocation7 [shape = 's32[2]{0}', space=sflag, size = 0x8, scoped, tag = 'scoped memory for tpu_custom_call.1']
    #allocation8 [shape = 'u8[65536]{0}', space=vmem, size = 0x10000, scoped, tag = 'output window, operand 0']
    #allocation9 [shape = 'u8[4096]{0}', space=vmem, size = 0x1000, scoped, tag = 'output window, operand 1, single buffered']
    #allocation10 [shape = 's32[1]{0}', space=sflag, size = 0x4, scoped, tag = 'scoped memory for tpu_custom_call.1']
    #allocation11 [shape = 'u8[4096]{0}', space=vmem, size = 0x1000, scoped, tag = 'output window, operand 2, single buffered']
    %14 = vsyncpa [#allocation6], 0
    %15 = vsyncpa [#allocation7], 0
    %s16 = scalar_lea.sflag [#allocation7], 1
    %17 = vsyncpa %s16, 0
    %18 = vsyncpa [#allocation10], 0
    loop: start=0, step=1, limit=4
    $region2: #{tpu_custom_call.1} parent=1 // loop_pre_header
      _
    $region3: #{tpu_custom_call.1} parent=1 // loop_header
      %s20 = sphi 0, %s24
      %p21 = scmp.ge.s32.totalorder %s20, 4
      %s30 = sphi 0, %s32
      %s33 = sphi 0, %s30
      %s34 = sphi 0, %s33
      %s50 = sphi 0, %s34
      %s54 = sphi 0, %s54
      %s56 = sphi 0, %s54
      %s57 = sphi 0, %s56
      %s71 = sphi 0, %s57
      %s75 = sphi 0, %s75
      %s77 = sphi 0, %s75
      %s78 = sphi 0, %s77
      %s92 = sphi 0, %s78
      %s96 = sphi 0, %s96
      %s98 = sphi 0, %s96
      %s99 = sphi 0, %s98
      %s113 = sphi 0, %s99
      %s117 = sphi 0, %s117
      %s119 = sphi 0, %s117
      %s120 = sphi 0, %s119
      %s134 = sphi 0, %s120
      %s138 = sphi 0, %s138
      %s140 = sphi 0, %s138
      %s141 = sphi 0, %s140
      %s155 = sphi 0, %s141
      %s161 = sphi 0, %s163
      %s164 = sphi 0, %s161
      %s165 = sphi 0, %s164
      %s181 = sphi 0, %s165
      %s185 = sphi 0, %s185
      %s187 = sphi 0, %s185
      %s188 = sphi 0, %s187
      %s202 = sphi 0, %s188
      %s206 = sphi 0, %s206
      %s208 = sphi 0, %s206
      %s209 = sphi 0, %s208
      %s223 = sphi 0, %s209
    $region4: #{tpu_custom_call.1} parent=1 // loop_header_branch
      %23 = sbr.rel (%p21) target = $region8
    $region5: #{tpu_custom_call.1} parent=1 // loop_body
      %s25 = ssub.s32 %s20, 1
      %s26 = ssub.s32 %s20, 2
      %s27 = sadd.s32 %s20, 1
      %s28 = ssub.s32 %s20, %s27
      %p29 = scmp.eq.s32.totalorder %s28, 0
      %s31 = sadd.s32 %s30, 1
      %s32 = scalar_select %p29, %s30, %s31
      %p35 = pneg %p29
      %p36 = scmp.eq.s32.totalorder %s20, 1
      %p37 = por %p35, %p36
      %p38 = scmp.ne.s32.totalorder %s30, %s33
      %p39 = scmp.eq.s32.totalorder %s20, 0
      %p40 = por %p38, %p39
      %p41 = scmp.ne.s32.totalorder %s30, %s33
      %p42 = scmp.eq.s32.totalorder %s25, 1
      %p43 = por %p41, %p42
      %p44 = scmp.ne.s32.totalorder %s33, %s34
      %p45 = scmp.eq.s32.totalorder %s25, 0
      %p46 = por %p44, %p45
      %p47 = scmp.ne.s32.totalorder %s33, %s34
      %p48 = scmp.eq.s32.totalorder %s26, 1
      %p49 = por %p47, %p48
      %p51 = scmp.ne.s32.totalorder %s34, %s50
      %p52 = scmp.eq.s32.totalorder %s26, 0
      %p53 = por %p51, %p52
      %s55 = sadd.s32 %s54, 1
      %p58 = scmp.eq.s32.totalorder %s20, 1
      %p59 = scmp.ne.s32.totalorder %s54, %s56
      %p60 = scmp.eq.s32.totalorder %s20, 0
      %p61 = por %p59, %p60
      %p62 = scmp.ne.s32.totalorder %s54, %s56
      %p63 = scmp.eq.s32.totalorder %s25, 1
      %p64 = por %p62, %p63
      %p65 = scmp.ne.s32.totalorder %s56, %s57
      %p66 = scmp.eq.s32.totalorder %s25, 0
      %p67 = por %p65, %p66
      %p68 = scmp.ne.s32.totalorder %s56, %s57
      %p69 = scmp.eq.s32.totalorder %s26, 1
      %p70 = por %p68, %p69
      %p72 = scmp.ne.s32.totalorder %s57, %s71
      %p73 = scmp.eq.s32.totalorder %s26, 0
      %p74 = por %p72, %p73
      %s76 = sadd.s32 %s75, 1
      %p79 = scmp.eq.s32.totalorder %s20, 1
      %p80 = scmp.ne.s32.totalorder %s75, %s77
      %p81 = scmp.eq.s32.totalorder %s20, 0
      %p82 = por %p80, %p81
      %p83 = scmp.ne.s32.totalorder %s75, %s77
      %p84 = scmp.eq.s32.totalorder %s25, 1
      %p85 = por %p83, %p84
      %p86 = scmp.ne.s32.totalorder %s77, %s78
      %p87 = scmp.eq.s32.totalorder %s25, 0
      %p88 = por %p86, %p87
      %p89 = scmp.ne.s32.totalorder %s77, %s78
      %p90 = scmp.eq.s32.totalorder %s26, 1
      %p91 = por %p89, %p90
      %p93 = scmp.ne.s32.totalorder %s78, %s92
      %p94 = scmp.eq.s32.totalorder %s26, 0
      %p95 = por %p93, %p94
      %s97 = sadd.s32 %s96, 1
      %p100 = scmp.eq.s32.totalorder %s20, 1
      %p101 = scmp.ne.s32.totalorder %s96, %s98
      %p102 = scmp.eq.s32.totalorder %s20, 0
      %p103 = por %p101, %p102
      %p104 = scmp.ne.s32.totalorder %s96, %s98
      %p105 = scmp.eq.s32.totalorder %s25, 1
      %p106 = por %p104, %p105
      %p107 = scmp.ne.s32.totalorder %s98, %s99
      %p108 = scmp.eq.s32.totalorder %s25, 0
      %p109 = por %p107, %p108
      %p110 = scmp.ne.s32.totalorder %s98, %s99
      %p111 = scmp.eq.s32.totalorder %s26, 1
      %p112 = por %p110, %p111
      %p114 = scmp.ne.s32.totalorder %s99, %s113
      %p115 = scmp.eq.s32.totalorder %s26, 0
      %p116 = por %p114, %p115
      %s118 = sadd.s32 %s117, 1
      %p121 = scmp.eq.s32.totalorder %s20, 1
      %p122 = scmp.ne.s32.totalorder %s117, %s119
      %p123 = scmp.eq.s32.totalorder %s20, 0
      %p124 = por %p122, %p123
      %p125 = scmp.ne.s32.totalorder %s117, %s119
      %p126 = scmp.eq.s32.totalorder %s25, 1
      %p127 = por %p125, %p126
      %p128 = scmp.ne.s32.totalorder %s119, %s120
      %p129 = scmp.eq.s32.totalorder %s25, 0
      %p130 = por %p128, %p129
      %p131 = scmp.ne.s32.totalorder %s119, %s120
      %p132 = scmp.eq.s32.totalorder %s26, 1
      %p133 = por %p131, %p132
      %p135 = scmp.ne.s32.totalorder %s120, %s134
      %p136 = scmp.eq.s32.totalorder %s26, 0
      %p137 = por %p135, %p136
      %s139 = sadd.s32 %s138, 1
      %p142 = scmp.eq.s32.totalorder %s20, 1
      %p143 = scmp.ne.s32.totalorder %s138, %s140
      %p144 = scmp.eq.s32.totalorder %s20, 0
      %p145 = por %p143, %p144
      %p146 = scmp.ne.s32.totalorder %s138, %s140
      %p147 = scmp.eq.s32.totalorder %s25, 1
      %p148 = por %p146, %p147
      %p149 = scmp.ne.s32.totalorder %s140, %s141
      %p150 = scmp.eq.s32.totalorder %s25, 0
      %p151 = por %p149, %p150
      %p152 = scmp.ne.s32.totalorder %s140, %s141
      %p153 = scmp.eq.s32.totalorder %s26, 1
      %p154 = por %p152, %p153
      %p156 = scmp.ne.s32.totalorder %s141, %s155
      %p157 = scmp.eq.s32.totalorder %s26, 0
      %p158 = por %p156, %p157
      %s159 = ssub.s32 %s20, %s27
      %p160 = scmp.eq.s32.totalorder %s159, 0
      %s162 = sadd.s32 %s161, 1
      %s163 = scalar_select %p160, %s161, %s162
      %p166 = pneg %p160
      %p167 = scmp.eq.s32.totalorder %s20, 1
      %p168 = por %p166, %p167
      %p169 = scmp.ne.s32.totalorder %s161, %s164
      %p170 = scmp.eq.s32.totalorder %s20, 0
      %p171 = por %p169, %p170
      %p172 = scmp.ne.s32.totalorder %s161, %s164
      %p173 = scmp.eq.s32.totalorder %s25, 1
      %p174 = por %p172, %p173
      %p175 = scmp.ne.s32.totalorder %s164, %s165
      %p176 = scmp.eq.s32.totalorder %s25, 0
      %p177 = por %p175, %p176
      %p178 = scmp.ne.s32.totalorder %s164, %s165
      %p179 = scmp.eq.s32.totalorder %s26, 1
      %p180 = por %p178, %p179
      %p182 = scmp.ne.s32.totalorder %s165, %s181
      %p183 = scmp.eq.s32.totalorder %s26, 0
      %p184 = por %p182, %p183
      %s186 = sadd.s32 %s185, 1
      %p189 = scmp.eq.s32.totalorder %s20, 1
      %p190 = scmp.ne.s32.totalorder %s185, %s187
      %p191 = scmp.eq.s32.totalorder %s20, 0
      %p192 = por %p190, %p191
      %p193 = scmp.ne.s32.totalorder %s185, %s187
      %p194 = scmp.eq.s32.totalorder %s25, 1
      %p195 = por %p193, %p194
      %p196 = scmp.ne.s32.totalorder %s187, %s188
      %p197 = scmp.eq.s32.totalorder %s25, 0
      %p198 = por %p196, %p197
      %p199 = scmp.ne.s32.totalorder %s187, %s188
      %p200 = scmp.eq.s32.totalorder %s26, 1
      %p201 = por %p199, %p200
      %p203 = scmp.ne.s32.totalorder %s188, %s202
      %p204 = scmp.eq.s32.totalorder %s26, 0
      %p205 = por %p203, %p204
      %s207 = sadd.s32 %s206, 1
      %p210 = scmp.eq.s32.totalorder %s20, 1
      %p211 = scmp.ne.s32.totalorder %s206, %s208
      %p212 = scmp.eq.s32.totalorder %s20, 0
      %p213 = por %p211, %p212
      %p214 = scmp.ne.s32.totalorder %s206, %s208
      %p215 = scmp.eq.s32.totalorder %s25, 1
      %p216 = por %p214, %p215
      %p217 = scmp.ne.s32.totalorder %s208, %s209
      %p218 = scmp.eq.s32.totalorder %s25, 0
      %p219 = por %p217, %p218
      %p220 = scmp.ne.s32.totalorder %s208, %s209
      %p221 = scmp.eq.s32.totalorder %s26, 1
      %p222 = por %p220, %p221
      %p224 = scmp.ne.s32.totalorder %s209, %s223
      %p225 = scmp.eq.s32.totalorder %s26, 0
      %p226 = por %p224, %p225
      %p227 = scmp.le.s32.totalorder 1, %s20
      %p228 = scmp.lt.s32.totalorder %s20, 3
      %p229 = pnand %p227, %p228
      %p230 = pneg %p229
      // Predicated region
      $region9: #{tpu_custom_call.1} parent=5 // pred_check
        _
      $region10: #{tpu_custom_call.1} parent=5 // pred_check_branch
        %232 = sbr.rel (%p229) target = $region12
      $region11: #{tpu_custom_call.1} parent=5 // pred_region
        %s233 = ssub.s32 %s20, 1
        // Predicated region
        $region13: #{tpu_custom_call.1} parent=11 // pred_check
          %p234 = pneg %p67
        $region14: #{tpu_custom_call.1} parent=11 // pred_check_branch
          %236 = sbr.rel (%p234) target = $region16
        $region15: #{tpu_custom_call.1} parent=11 // pred_region
          _
        $region16: #{tpu_custom_call.1} parent=11 // pred_fallthru
          _
        // Predicated region
        $region17: #{tpu_custom_call.1} parent=11 // pred_check
          %p237 = pneg %p88
        $region18: #{tpu_custom_call.1} parent=11 // pred_check_branch
          %239 = sbr.rel (%p237) target = $region20
        $region19: #{tpu_custom_call.1} parent=11 // pred_region
          _
        $region20: #{tpu_custom_call.1} parent=11 // pred_fallthru
          _
        // Predicated region
        $region21: #{tpu_custom_call.1} parent=11 // pred_check
          %p240 = pneg %p109
        $region22: #{tpu_custom_call.1} parent=11 // pred_check_branch
          %242 = sbr.rel (%p240) target = $region24
        $region23: #{tpu_custom_call.1} parent=11 // pred_region
          _
        $region24: #{tpu_custom_call.1} parent=11 // pred_fallthru
          _
        // Predicated region
        $region25: #{tpu_custom_call.1} parent=11 // pred_check
          %p243 = pneg %p130
        $region26: #{tpu_custom_call.1} parent=11 // pred_check_branch
          %245 = sbr.rel (%p243) target = $region28
        $region27: #{tpu_custom_call.1} parent=11 // pred_region
          %s247 = ssub.s32 8192, 8192
          %248 = vsyncadd [#allocation6], %s247
          %s249 = sshll.u32 [#allocation5], 4
          %s250 = int_to_ptr.vmem [resolvable:$true] %s249
          %255 = dma.hbm_to_vmem [thread:$0]  %s4, 8192, %s250, [#allocation6], 512, 512, 32
        $region28: #{tpu_custom_call.1} parent=11 // pred_fallthru
          _
        // Predicated region
        $region29: #{tpu_custom_call.1} parent=11 // pred_check
          %p256 = pneg %p151
        $region30: #{tpu_custom_call.1} parent=11 // pred_check_branch
          %258 = sbr.rel (%p256) target = $region32
        $region31: #{tpu_custom_call.1} parent=11 // pred_region
          _
        $region32: #{tpu_custom_call.1} parent=11 // pred_fallthru
          _
      $region12: #{tpu_custom_call.1} parent=5 // pred_fallthru
        _
      %p259 = scmp.lt.s32.totalorder %s20, 2
      // Predicated region
      $region33: #{tpu_custom_call.1} parent=5 // pred_check
        %p260 = pneg %p259
      $region34: #{tpu_custom_call.1} parent=5 // pred_check_branch
        %262 = sbr.rel (%p260) target = $region36
      $region35: #{tpu_custom_call.1} parent=5 // pred_region
        // Predicated region
        $region37: #{tpu_custom_call.1} parent=35 // pred_check
          %p263 = pneg %p40
        $region38: #{tpu_custom_call.1} parent=35 // pred_check_branch
          %265 = sbr.rel (%p263) target = $region40
        $region39: #{tpu_custom_call.1} parent=35 // pred_region
          %s266 = smul.u32 8, %s20
          %p267 = scmp.lt.s32.totalorder %s266, 15
          %s268 = scalar_select %p267, %s266, 15
          %s269 = smul.addr %s268, 8
          %s270 = scalar_lea.vmem %s0, %s269
          %s271 = smul.u32 8, %s20
        $region40: #{tpu_custom_call.1} parent=35 // pred_fallthru
          _
      $region36: #{tpu_custom_call.1} parent=5 // pred_fallthru
        _
      %p272 = scmp.le.s32.totalorder 1, %s20
      %p273 = scmp.lt.s32.totalorder %s20, 3
      %p274 = pnand %p272, %p273
      %p275 = pneg %p274
      // Predicated region
      $region41: #{tpu_custom_call.1} parent=5 // pred_check
        _
      $region42: #{tpu_custom_call.1} parent=5 // pred_check_branch
        %277 = sbr.rel (%p274) target = $region44
      $region43: #{tpu_custom_call.1} parent=5 // pred_region
        %s278 = ssub.s32 %s20, 1
        // Predicated region
        $region45: #{tpu_custom_call.1} parent=43 // pred_check
          %p279 = pneg %p130
        $region46: #{tpu_custom_call.1} parent=43 // pred_check_branch
          %281 = sbr.rel (%p279) target = $region48
        $region47: #{tpu_custom_call.1} parent=43 // pred_region
          %282 = dma.done [#allocation6], 8192
        $region48: #{tpu_custom_call.1} parent=43 // pred_fallthru
          _
        %s283 = smul.u32 8, %s25
        %p284 = scmp.lt.s32.totalorder %s283, 15
        %s285 = scalar_select %p284, %s283, 15
        %s286 = smul.addr %s285, 8
        %s287 = scalar_lea.vmem %s0, %s286
        %p288 = pneg %p46
        %p289 = pneg %p43
        %p290 = pneg %p67
        %p291 = pneg %p64
        %p292 = pneg %p88
        %p293 = pneg %p85
        %p294 = pneg %p109
        %p295 = pneg %p106
        %p296 = pneg %p130
        %p297 = pneg %p127
        %p298 = pneg %p151
        %p299 = pneg %p148
        %p300 = pneg %p177
        %p301 = pneg %p174
        %s302 = sand.u32 %s164, 1
        %s303 = scalar_lea.sflag [#allocation7], %s302
        %s304 = sand.u32 %s164, 1
        %s305 = smul.addr %s304, 64
        %s306 = scalar_lea.vmem [#allocation8], %s305
        %p307 = pneg %p198
        %p308 = pneg %p195
        %p309 = pneg %p219
        %p310 = pneg %p216
        %s311 = smul.u32 8, %s25
        %p312 = scmp.lt.s32.totalorder %s311, 15
        %s313 = scalar_select %p312, %s311, 15
        %s314 = smul.addr %s313, 8
        %s315 = scalar_lea.vmem %s0, %s314
        %s316 = smul.u32 8, %s25
        %s317 = smul.u32 8, %s25
        %p318 = scmp.eq.s32.totalorder %s25, 0
        // Predicated region
        $region49: #{tpu_custom_call.1} parent=43 // pred_check
          %p319 = pneg %p318
        $region50: #{tpu_custom_call.1} parent=43 // pred_check_branch
          %321 = sbr.rel (%p319) target = $region52
        $region51: #{tpu_custom_call.1} parent=43 // pred_region
          %v322 = vld [vmem:[%s1] sm:$0xff]
          %323 = vst [vmem:[#allocation3] sm:$0xff] %v322
          %v324 = vld [vmem:[%s2] sm:$0xff]
          %325 = vst [vmem:[#allocation4] sm:$0xff] %v324
        $region52: #{tpu_custom_call.1} parent=43 // pred_fallthru
          _
        %v326 = vld [vmem:[%s315] sm:$0xff]
        %v327 = vld [vmem:[%s315 + $0x8] sm:$0xff]
        %v328 = vld [vmem:[%s315 + $0x10] sm:$0xff]
        %v329 = vld [vmem:[%s315 + $0x18] sm:$0xff]
        %v330 = vld [vmem:[%s315 + $0x20] sm:$0xff]
        %v331 = vld [vmem:[%s315 + $0x28] sm:$0xff]
        %v332 = vld [vmem:[%s315 + $0x30] sm:$0xff]
        %v333 = vld [vmem:[%s315 + $0x38] sm:$0xff]
        %v334 = vld [vmem:[%s3] sm:$0xff]
        %v335 = vld [vmem:[%s3 + $0x8] sm:$0xff]
        %v336 = vld [vmem:[%s3 + $0x10] sm:$0xff]
        %v337 = vld [vmem:[%s3 + $0x18] sm:$0xff]
        %v338 = vld [vmem:[%s5] sm:$0xf]
        %v340 = vlaneseq
        %v341 = vshrl.u32 %v340, 7
        %v342 = vsub.s32 0, %v341
        %v343 = vrot.slane %v338, %v342
        %v344 = vlaneseq
        %v345 = vshrl.u32 %v344, 7
        %v346 = vsub.s32 1, %v345
        %v347 = vrot.slane %v338, %v346
        %v348 = vlaneseq
        %v349 = vshrl.u32 %v348, 7
        %v350 = vsub.s32 2, %v349
        %v351 = vrot.slane %v338, %v350
        %v352 = vlaneseq
        %v353 = vshrl.u32 %v352, 7
        %v354 = vsub.s32 3, %v353
        %v355 = vrot.slane %v338, %v354
        %vm360 = vcmask 64512
        %v362 = vsel %vm360, %v326, 0
        %v365 = vsel %vm360, %v327, 0
        %v368 = vsel %vm360, %v328, 0
        %v371 = vsel %vm360, %v329, 0
        %v374 = vsel %vm360, %v330, 0
        %v377 = vsel %vm360, %v331, 0
        %v380 = vsel %vm360, %v332, 0
        %v383 = vsel %vm360, %v333, 0
        %385 = vmatprep.subr.mxu0 %v335
        %386 = vmatpush1.msra.mxu0 %v334
        %387 = vmatprep.subr.mxu0 0.0
        %388 = vmatpush1.msra.mxu0 0.0
        %389 = vmatprep.subr.mxu0 0.0
        %390 = vmatpush1.msra.mxu0 0.0
        %391 = vmatprep.subr.mxu0 0.0
        %392 = vmatpush1.msra.mxu0 0.0
        %393 = vmatprep.subr.mxu0 0.0
        %394 = vmatpush1.msra.mxu0 0.0
        %395 = vmatprep.subr.mxu0 0.0
        %396 = vmatpush1.msra.mxu0 0.0
        %397 = vmatprep.subr.mxu0 0.0
        %398 = vmatpush1.msra.mxu0 0.0
        %399 = vmatprep.subr.mxu0 0.0
        %400 = vmatpush1.msra.mxu0 0.0
        %401 = vmatprep.subr.mxu0 0.0
        %402 = vmatpush1.msra.mxu0 0.0
        %403 = vmatprep.subr.mxu0 0.0
        %404 = vmatpush1.msra.mxu0 0.0
        %405 = vmatprep.subr.mxu0 0.0
        %406 = vmatpush1.msra.mxu0 0.0
        %407 = vmatprep.subr.mxu0 0.0
        %408 = vmatpush1.msra.mxu0 0.0
        %409 = vmatprep.subr.mxu0 0.0
        %410 = vmatpush1.msra.mxu0 0.0
        %411 = vmatprep.subr.mxu0 0.0
        %412 = vmatpush1.msra.mxu0 0.0
        %413 = vmatprep.subr.mxu0 0.0
        %414 = vmatpush1.msra.mxu0 0.0
        %415 = vmatprep.subr.mxu0 0.0
        %416 = vmatpush1.msra.mxu0 0.0
        %417 = vmatprep.subr.mxu0 0.0
        %418 = vmatpush1.msra.mxu0 0.0
        %419 = vmatprep.subr.mxu0 0.0
        %420 = vmatpush1.msra.mxu0 0.0
        %421 = vmatprep.subr.mxu0 0.0
        %422 = vmatpush1.msra.mxu0 0.0
        %423 = vmatprep.subr.mxu0 0.0
        %424 = vmatpush1.msra.mxu0 0.0
        %425 = vmatprep.subr.mxu0 0.0
        %426 = vmatpush1.msra.mxu0 0.0
        %427 = vmatprep.subr.mxu0 0.0
        %428 = vmatpush1.msra.mxu0 0.0
        %429 = vmatprep.subr.mxu0 0.0
        %430 = vmatpush1.msra.mxu0 0.0
        %431 = vmatprep.subr.mxu0 0.0
        %432 = vmatpush1.msra.mxu0 0.0
        %433 = vmatprep.subr.mxu0 0.0
        %434 = vmatpush1.msra.mxu0 0.0
        %435 = vmatprep.subr.mxu0 0.0
        %436 = vmatpush1.msra.mxu0 0.0
        %437 = vmatprep.subr.mxu0 0.0
        %438 = vmatpush1.msra.mxu0 0.0
        %439 = vmatprep.subr.mxu0 0.0
        %440 = vmatpush1.msra.mxu0 0.0
        %441 = vmatprep.subr.mxu0 0.0
        %442 = vmatpush1.msra.mxu0 0.0
        %443 = vmatprep.subr.mxu0 0.0
        %444 = vmatpush1.msra.mxu0 0.0
        %445 = vmatprep.subr.mxu0 0.0
        %446 = vmatpush1.msra.mxu0 0.0
        %447 = vmatprep.subr.mxu0 0.0
        %448 = vmatpush1.msra.mxu0 0.0
        %449 = vmatprep.mubr.f32.mxu0 0.0
        %450 = vmatmul.mubr.f32.gmra.mrb[0].mxu0 %v362
        %v451 = vpop.f32.mrb[0].mxu0
        %v452 = vadd.f32 %v343, %v451
        %v453 = vpop.f32.mrb[0].mxu0
        %v454 = vadd.f32 %v347, %v453
        %455 = vmatprep.mubr.f32.mxu0 0.0
        %456 = vmatmul.mubr.f32.gmra.mrb[0].mxu0 %v365
        %v457 = vpop.f32.mrb[0].mxu0
        %v458 = vadd.f32 %v343, %v457
        %v459 = vpop.f32.mrb[0].mxu0
        %v460 = vadd.f32 %v347, %v459
        %461 = vmatprep.mubr.f32.mxu0 0.0
        %462 = vmatmul.mubr.f32.gmra.mrb[0].mxu0 %v368
        %v463 = vpop.f32.mrb[0].mxu0
        %v464 = vadd.f32 %v343, %v463
        %v465 = vpop.f32.mrb[0].mxu0
        %v466 = vadd.f32 %v347, %v465
        %467 = vmatprep.mubr.f32.mxu0 0.0
        %468 = vmatmul.mubr.f32.gmra.mrb[0].mxu0 %v371
        %v469 = vpop.f32.mrb[0].mxu0
        %v470 = vadd.f32 %v343, %v469
        %v471 = vpop.f32.mrb[0].mxu0
        %v472 = vadd.f32 %v347, %v471
        %473 = vmatprep.mubr.f32.mxu0 0.0
        %474 = vmatmul.mubr.f32.gmra.mrb[0].mxu0 %v374
        %v475 = vpop.f32.mrb[0].mxu0
        %v476 = vadd.f32 %v343, %v475
        %v477 = vpop.f32.mrb[0].mxu0
        %v478 = vadd.f32 %v347, %v477
        %479 = vmatprep.mubr.f32.mxu0 0.0
        %480 = vmatmul.mubr.f32.gmra.mrb[0].mxu0 %v377
        %v481 = vpop.f32.mrb[0].mxu0
        %v482 = vadd.f32 %v343, %v481
        %v483 = vpop.f32.mrb[0].mxu0
        %v484 = vadd.f32 %v347, %v483
        %485 = vmatprep.mubr.f32.mxu0 0.0
        %486 = vmatmul.mubr.f32.gmra.mrb[0].mxu0 %v380
        %v487 = vpop.f32.mrb[0].mxu0
        %v488 = vadd.f32 %v343, %v487
        %v489 = vpop.f32.mrb[0].mxu0
        %v490 = vadd.f32 %v347, %v489
        %491 = vmatprep.mubr.f32.mxu0 0.0
        %492 = vmatmul.mubr.f32.gmra.mrb[0].mxu0 %v383
        %v493 = vpop.f32.mrb[0].mxu0
        %v494 = vadd.f32 %v343, %v493
        %v495 = vpop.f32.mrb[0].mxu0
        %v496 = vadd.f32 %v347, %v495
        %497 = vdwg.mxu0
        %498 = vmatprep.subr.mxu0 %v337
        %499 = vmatpush1.msra.mxu0 %v336
        %500 = vmatprep.subr.mxu0 0.0
        %501 = vmatpush1.msra.mxu0 0.0
        %502 = vmatprep.subr.mxu0 0.0
        %503 = vmatpush1.msra.mxu0 0.0
        %504 = vmatprep.subr.mxu0 0.0
        %505 = vmatpush1.msra.mxu0 0.0
        %506 = vmatprep.subr.mxu0 0.0
        %507 = vmatpush1.msra.mxu0 0.0
        %508 = vmatprep.subr.mxu0 0.0
        %509 = vmatpush1.msra.mxu0 0.0
        %510 = vmatprep.subr.mxu0 0.0
        %511 = vmatpush1.msra.mxu0 0.0
        %512 = vmatprep.subr.mxu0 0.0
        %513 = vmatpush1.msra.mxu0 0.0
        %514 = vmatprep.subr.mxu0 0.0
        %515 = vmatpush1.msra.mxu0 0.0
        %516 = vmatprep.subr.mxu0 0.0
        %517 = vmatpush1.msra.mxu0 0.0
        %518 = vmatprep.subr.mxu0 0.0
        %519 = vmatpush1.msra.mxu0 0.0
        %520 = vmatprep.subr.mxu0 0.0
        %521 = vmatpush1.msra.mxu0 0.0
        %522 = vmatprep.subr.mxu0 0.0
        %523 = vmatpush1.msra.mxu0 0.0
        %524 = vmatprep.subr.mxu0 0.0
        %525 = vmatpush1.msra.mxu0 0.0
        %526 = vmatprep.subr.mxu0 0.0
        %527 = vmatpush1.msra.mxu0 0.0
        %528 = vmatprep.subr.mxu0 0.0
        %529 = vmatpush1.msra.mxu0 0.0
        %530 = vmatprep.subr.mxu0 0.0
        %531 = vmatpush1.msra.mxu0 0.0
        %532 = vmatprep.subr.mxu0 0.0
        %533 = vmatpush1.msra.mxu0 0.0
        %534 = vmatprep.subr.mxu0 0.0
        %535 = vmatpush1.msra.mxu0 0.0
        %536 = vmatprep.subr.mxu0 0.0
        %537 = vmatpush1.msra.mxu0 0.0
        %538 = vmatprep.subr.mxu0 0.0
        %539 = vmatpush1.msra.mxu0 0.0
        %540 = vmatprep.subr.mxu0 0.0
        %541 = vmatpush1.msra.mxu0 0.0
        %542 = vmatprep.subr.mxu0 0.0
        %543 = vmatpush1.msra.mxu0 0.0
        %544 = vmatprep.subr.mxu0 0.0
        %545 = vmatpush1.msra.mxu0 0.0
        %546 = vmatprep.subr.mxu0 0.0
        %547 = vmatpush1.msra.mxu0 0.0
        %548 = vmatprep.subr.mxu0 0.0
        %549 = vmatpush1.msra.mxu0 0.0
        %550 = vmatprep.subr.mxu0 0.0
        %551 = vmatpush1.msra.mxu0 0.0
        %552 = vmatprep.subr.mxu0 0.0
        %553 = vmatpush1.msra.mxu0 0.0
        %554 = vmatprep.subr.mxu0 0.0
        %555 = vmatpush1.msra.mxu0 0.0
        %556 = vmatprep.subr.mxu0 0.0
        %557 = vmatpush1.msra.mxu0 0.0
        %558 = vmatprep.subr.mxu0 0.0
        %559 = vmatpush1.msra.mxu0 0.0
        %560 = vmatprep.subr.mxu0 0.0
        %561 = vmatpush1.msra.mxu0 0.0
        %562 = vmatprep.mubr.f32.mxu0 0.0
        %563 = vmatmul.mubr.f32.gmra.mrb[0].mxu0 %v362
        %v564 = vpop.f32.mrb[0].mxu0
        %v565 = vadd.f32 %v351, %v564
        %v566 = vpop.f32.mrb[0].mxu0
        %v567 = vadd.f32 %v355, %v566
        %568 = vmatprep.mubr.f32.mxu0 0.0
        %569 = vmatmul.mubr.f32.gmra.mrb[0].mxu0 %v365
        %v570 = vpop.f32.mrb[0].mxu0
        %v571 = vadd.f32 %v351, %v570
        %v572 = vpop.f32.mrb[0].mxu0
        %v573 = vadd.f32 %v355, %v572
        %574 = vmatprep.mubr.f32.mxu0 0.0
        %575 = vmatmul.mubr.f32.gmra.mrb[0].mxu0 %v368
        %v576 = vpop.f32.mrb[0].mxu0
        %v577 = vadd.f32 %v351, %v576
        %v578 = vpop.f32.mrb[0].mxu0
        %v579 = vadd.f32 %v355, %v578
        %580 = vmatprep.mubr.f32.mxu0 0.0
        %581 = vmatmul.mubr.f32.gmra.mrb[0].mxu0 %v371
        %v582 = vpop.f32.mrb[0].mxu0
        %v583 = vadd.f32 %v351, %v582
        %v584 = vpop.f32.mrb[0].mxu0
        %v585 = vadd.f32 %v355, %v584
        %586 = vmatprep.mubr.f32.mxu0 0.0
        %587 = vmatmul.mubr.f32.gmra.mrb[0].mxu0 %v374
        %v588 = vpop.f32.mrb[0].mxu0
        %v589 = vadd.f32 %v351, %v588
        %v590 = vpop.f32.mrb[0].mxu0
        %v591 = vadd.f32 %v355, %v590
        %592 = vmatprep.mubr.f32.mxu0 0.0
        %593 = vmatmul.mubr.f32.gmra.mrb[0].mxu0 %v377
        %v594 = vpop.f32.mrb[0].mxu0
        %v595 = vadd.f32 %v351, %v594
        %v596 = vpop.f32.mrb[0].mxu0
        %v597 = vadd.f32 %v355, %v596
        %598 = vmatprep.mubr.f32.mxu0 0.0
        %599 = vmatmul.mubr.f32.gmra.mrb[0].mxu0 %v380
        %v600 = vpop.f32.mrb[0].mxu0
        %v601 = vadd.f32 %v351, %v600
        %v602 = vpop.f32.mrb[0].mxu0
        %v603 = vadd.f32 %v355, %v602
        %604 = vmatprep.mubr.f32.mxu0 0.0
        %605 = vmatmul.mubr.f32.gmra.mrb[0].mxu0 %v383
        %v606 = vpop.f32.mrb[0].mxu0
        %v607 = vadd.f32 %v351, %v606
        %v608 = vpop.f32.mrb[0].mxu0
        %v609 = vadd.f32 %v355, %v608
        %610 = vdwg.mxu0
        %611 = vst [vmem:[#allocation2] sm:$0xff] %v452
        %612 = vst [vmem:[#allocation2 + $0x8] sm:$0xff] %v454
        %613 = vst [vmem:[#allocation2 + $0x10] sm:$0xff] %v565
        %614 = vst [vmem:[#allocation2 + $0x18] sm:$0xff] %v567
        %615 = vst [vmem:[#allocation2 + $0x20] sm:$0xff] %v458
        %616 = vst [vmem:[#allocation2 + $0x28] sm:$0xff] %v460
        %617 = vst [vmem:[#allocation2 + $0x30] sm:$0xff] %v571
        %618 = vst [vmem:[#allocation2 + $0x38] sm:$0xff] %v573
        %619 = vst [vmem:[#allocation2 + $0x40] sm:$0xff] %v464
        %620 = vst [vmem:[#allocation2 + $0x48] sm:$0xff] %v466
        %621 = vst [vmem:[#allocation2 + $0x50] sm:$0xff] %v577
        %622 = vst [vmem:[#allocation2 + $0x58] sm:$0xff] %v579
        %623 = vst [vmem:[#allocation2 + $0x60] sm:$0xff] %v470
        %624 = vst [vmem:[#allocation2 + $0x68] sm:$0xff] %v472
        %625 = vst [vmem:[#allocation2 + $0x70] sm:$0xff] %v583
        %626 = vst [vmem:[#allocation2 + $0x78] sm:$0xff] %v585
        %627 = vst [vmem:[#allocation2 + $0x80] sm:$0xff] %v476
        %628 = vst [vmem:[#allocation2 + $0x88] sm:$0xff] %v478
        %629 = vst [vmem:[#allocation2 + $0x90] sm:$0xff] %v589
        %630 = vst [vmem:[#allocation2 + $0x98] sm:$0xff] %v591
        %631 = vst [vmem:[#allocation2 + $0xa0] sm:$0xff] %v482
        %632 = vst [vmem:[#allocation2 + $0xa8] sm:$0xff] %v484
        %633 = vst [vmem:[#allocation2 + $0xb0] sm:$0xff] %v595
        %634 = vst [vmem:[#allocation2 + $0xb8] sm:$0xff] %v597
        %635 = vst [vmem:[#allocation2 + $0xc0] sm:$0xff] %v488
        %636 = vst [vmem:[#allocation2 + $0xc8] sm:$0xff] %v490
        %637 = vst [vmem:[#allocation2 + $0xd0] sm:$0xff] %v601
        %638 = vst [vmem:[#allocation2 + $0xd8] sm:$0xff] %v603
        %639 = vst [vmem:[#allocation2 + $0xe0] sm:$0xff] %v494
        %640 = vst [vmem:[#allocation2 + $0xe8] sm:$0xff] %v496
        %641 = vst [vmem:[#allocation2 + $0xf0] sm:$0xff] %v607
        %642 = vst [vmem:[#allocation2 + $0xf8] sm:$0xff] %v609
        %v643 = vld [vmem:[#allocation5] sm:$0xff]
        %v644 = vld [vmem:[#allocation5 + $0x8] sm:$0xff]
        %v645 = vld [vmem:[#allocation5 + $0x10] sm:$0xff]
        %v646 = vld [vmem:[#allocation5 + $0x18] sm:$0xff]
        %v647 = vld [vmem:[#allocation5 + $0x20] sm:$0xff]
        %v648 = vld [vmem:[#allocation5 + $0x28] sm:$0xff]
        %v649 = vld [vmem:[#allocation5 + $0x30] sm:$0xff]
        %v650 = vld [vmem:[#allocation5 + $0x38] sm:$0xff]
        %v651 = vld [vmem:[#allocation5 + $0x40] sm:$0xff]
        %v652 = vld [vmem:[#allocation5 + $0x48] sm:$0xff]
        %v653 = vld [vmem:[#allocation5 + $0x50] sm:$0xff]
        %v654 = vld [vmem:[#allocation5 + $0x58] sm:$0xff]
        %v655 = vld [vmem:[#allocation5 + $0x60] sm:$0xff]
        %v656 = vld [vmem:[#allocation5 + $0x68] sm:$0xff]
        %v657 = vld [vmem:[#allocation5 + $0x70] sm:$0xff]
        %v658 = vld [vmem:[#allocation5 + $0x78] sm:$0xff]
        %v659 = vld [vmem:[#allocation5 + $0x80] sm:$0xff]
        %v660 = vld [vmem:[#allocation5 + $0x88] sm:$0xff]
        %v661 = vld [vmem:[#allocation5 + $0x90] sm:$0xff]
        %v662 = vld [vmem:[#allocation5 + $0x98] sm:$0xff]
        %v663 = vld [vmem:[#allocation5 + $0xa0] sm:$0xff]
        %v664 = vld [vmem:[#allocation5 + $0xa8] sm:$0xff]
        %v665 = vld [vmem:[#allocation5 + $0xb0] sm:$0xff]
        %v666 = vld [vmem:[#allocation5 + $0xb8] sm:$0xff]
        %v667 = vld [vmem:[#allocation5 + $0xc0] sm:$0xff]
        %v668 = vld [vmem:[#allocation5 + $0xc8] sm:$0xff]
        %v669 = vld [vmem:[#allocation5 + $0xd0] sm:$0xff]
        %v670 = vld [vmem:[#allocation5 + $0xd8] sm:$0xff]
        %v671 = vld [vmem:[#allocation5 + $0xe0] sm:$0xff]
        %v672 = vld [vmem:[#allocation5 + $0xe8] sm:$0xff]
        %v673 = vld [vmem:[#allocation5 + $0xf0] sm:$0xff]
        %v674 = vld [vmem:[#allocation5 + $0xf8] sm:$0xff]
        %v675 = vld [vmem:[#allocation5 + $0x100] sm:$0xff]
        %v676 = vld [vmem:[#allocation5 + $0x108] sm:$0xff]
        %v677 = vld [vmem:[#allocation5 + $0x110] sm:$0xff]
        %v678 = vld [vmem:[#allocation5 + $0x118] sm:$0xff]
        %v679 = vld [vmem:[#allocation5 + $0x120] sm:$0xff]
        %v680 = vld [vmem:[#allocation5 + $0x128] sm:$0xff]
        %v681 = vld [vmem:[#allocation5 + $0x130] sm:$0xff]
        %v682 = vld [vmem:[#allocation5 + $0x138] sm:$0xff]
        %v683 = vld [vmem:[#allocation5 + $0x140] sm:$0xff]
        %v684 = vld [vmem:[#allocation5 + $0x148] sm:$0xff]
        %v685 = vld [vmem:[#allocation5 + $0x150] sm:$0xff]
        %v686 = vld [vmem:[#allocation5 + $0x158] sm:$0xff]
        %v687 = vld [vmem:[#allocation5 + $0x160] sm:$0xff]
        %v688 = vld [vmem:[#allocation5 + $0x168] sm:$0xff]
        %v689 = vld [vmem:[#allocation5 + $0x170] sm:$0xff]
        %v690 = vld [vmem:[#allocation5 + $0x178] sm:$0xff]
        %v691 = vld [vmem:[#allocation5 + $0x180] sm:$0xff]
        %v692 = vld [vmem:[#allocation5 + $0x188] sm:$0xff]
        %v693 = vld [vmem:[#allocation5 + $0x190] sm:$0xff]
        %v694 = vld [vmem:[#allocation5 + $0x198] sm:$0xff]
        %v695 = vld [vmem:[#allocation5 + $0x1a0] sm:$0xff]
        %v696 = vld [vmem:[#allocation5 + $0x1a8] sm:$0xff]
        %v697 = vld [vmem:[#allocation5 + $0x1b0] sm:$0xff]
        %v698 = vld [vmem:[#allocation5 + $0x1b8] sm:$0xff]
        %v699 = vld [vmem:[#allocation5 + $0x1c0] sm:$0xff]
        %v700 = vld [vmem:[#allocation5 + $0x1c8] sm:$0xff]
        %v701 = vld [vmem:[#allocation5 + $0x1d0] sm:$0xff]
        %v702 = vld [vmem:[#allocation5 + $0x1d8] sm:$0xff]
        %v703 = vld [vmem:[#allocation5 + $0x1e0] sm:$0xff]
        %v704 = vld [vmem:[#allocation5 + $0x1e8] sm:$0xff]
        %v705 = vld [vmem:[#allocation5 + $0x1f0] sm:$0xff]
        %v706 = vld [vmem:[#allocation5 + $0x1f8] sm:$0xff]
        %v707 = vld [vmem:[#allocation3] sm:$0xff]
        %v708 = vld [vmem:[#allocation4] sm:$0xff]
        %v709 = vld [vmem:[#allocation2] sm:$0xff]
        %v710 = vld [vmem:[#allocation2 + $0x8] sm:$0xff]
        %v711 = vld [vmem:[#allocation2 + $0x10] sm:$0xff]
        %v712 = vld [vmem:[#allocation2 + $0x18] sm:$0xff]
        %713 = vmatprep.subr.mxu0 %v644
        %714 = vmatpush1.msra.mxu0 %v643
        %715 = vmatprep.subr.mxu0 %v648
        %716 = vmatpush1.msra.mxu0 %v647
        %717 = vmatprep.subr.mxu0 %v652
        %718 = vmatpush1.msra.mxu0 %v651
        %719 = vmatprep.subr.mxu0 %v656
        %720 = vmatpush1.msra.mxu0 %v655
        %721 = vmatprep.subr.mxu0 %v660
        %722 = vmatpush1.msra.mxu0 %v659
        %723 = vmatprep.subr.mxu0 %v664
        %724 = vmatpush1.msra.mxu0 %v663
        %725 = vmatprep.subr.mxu0 %v668
        %726 = vmatpush1.msra.mxu0 %v667
        %727 = vmatprep.subr.mxu0 %v672
        %728 = vmatpush1.msra.mxu0 %v671
        %729 = vmatprep.subr.mxu0 %v676
        %730 = vmatpush1.msra.mxu0 %v675
        %731 = vmatprep.subr.mxu0 %v680
        %732 = vmatpush1.msra.mxu0 %v679
        %733 = vmatprep.subr.mxu0 %v684
        %734 = vmatpush1.msra.mxu0 %v683
        %735 = vmatprep.subr.mxu0 %v688
        %736 = vmatpush1.msra.mxu0 %v687
        %737 = vmatprep.subr.mxu0 %v692
        %738 = vmatpush1.msra.mxu0 %v691
        %739 = vmatprep.subr.mxu0 %v696
        %740 = vmatpush1.msra.mxu0 %v695
        %741 = vmatprep.subr.mxu0 %v700
        %742 = vmatpush1.msra.mxu0 %v699
        %743 = vmatprep.subr.mxu0 %v704
        %744 = vmatpush1.msra.mxu0 %v703
        %745 = vmatprep.subr.mxu0 0.0
        %746 = vmatpush1.msra.mxu0 0.0
        %747 = vmatprep.subr.mxu0 0.0
        %748 = vmatpush1.msra.mxu0 0.0
        %749 = vmatprep.subr.mxu0 0.0
        %750 = vmatpush1.msra.mxu0 0.0
        %751 = vmatprep.subr.mxu0 0.0
        %752 = vmatpush1.msra.mxu0 0.0
        %753 = vmatprep.subr.mxu0 0.0
        %754 = vmatpush1.msra.mxu0 0.0
        %755 = vmatprep.subr.mxu0 0.0
        %756 = vmatpush1.msra.mxu0 0.0
        %757 = vmatprep.subr.mxu0 0.0
        %758 = vmatpush1.msra.mxu0 0.0
        %759 = vmatprep.subr.mxu0 0.0
        %760 = vmatpush1.msra.mxu0 0.0
        %761 = vmatprep.subr.mxu0 0.0
        %762 = vmatpush1.msra.mxu0 0.0
        %763 = vmatprep.subr.mxu0 0.0
        %764 = vmatpush1.msra.mxu0 0.0
        %765 = vmatprep.subr.mxu0 0.0
        %766 = vmatpush1.msra.mxu0 0.0
        %767 = vmatprep.subr.mxu0 0.0
        %768 = vmatpush1.msra.mxu0 0.0
        %769 = vmatprep.subr.mxu0 0.0
        %770 = vmatpush1.msra.mxu0 0.0
        %771 = vmatprep.subr.mxu0 0.0
        %772 = vmatpush1.msra.mxu0 0.0
        %773 = vmatprep.subr.mxu0 0.0
        %774 = vmatpush1.msra.mxu0 0.0
        %775 = vmatprep.subr.mxu0 0.0
        %776 = vmatpush1.msra.mxu0 0.0
        %777 = vmatprep.mubr.f32.mxu0 0.0
        %778 = vmatmul.mubr.f32.gmra.mrb[0].mxu0 %v707
        %v779 = vpop.f32.mrb[0].mxu0
        %v780 = vadd.f32 0.0, %v779
        %v781 = vpop.f32.mrb[0].mxu0
        %v782 = vadd.f32 0.0, %v781
        %783 = vdwg.mxu0
        %784 = vmatprep.subr.mxu0 %v646
        %785 = vmatpush1.msra.mxu0 %v645
        %786 = vmatprep.subr.mxu0 %v650
        %787 = vmatpush1.msra.mxu0 %v649
        %788 = vmatprep.subr.mxu0 %v654
        %789 = vmatpush1.msra.mxu0 %v653
        %790 = vmatprep.subr.mxu0 %v658
        %791 = vmatpush1.msra.mxu0 %v657
        %792 = vmatprep.subr.mxu0 %v662
        %793 = vmatpush1.msra.mxu0 %v661
        %794 = vmatprep.subr.mxu0 %v666
        %795 = vmatpush1.msra.mxu0 %v665
        %796 = vmatprep.subr.mxu0 %v670
        %797 = vmatpush1.msra.mxu0 %v669
        %798 = vmatprep.subr.mxu0 %v674
        %799 = vmatpush1.msra.mxu0 %v673
        %800 = vmatprep.subr.mxu0 %v678
        %801 = vmatpush1.msra.mxu0 %v677
        %802 = vmatprep.subr.mxu0 %v682
        %803 = vmatpush1.msra.mxu0 %v681
        %804 = vmatprep.subr.mxu0 %v686
        %805 = vmatpush1.msra.mxu0 %v685
        %806 = vmatprep.subr.mxu0 %v690
        %807 = vmatpush1.msra.mxu0 %v689
        %808 = vmatprep.subr.mxu0 %v694
        %809 = vmatpush1.msra.mxu0 %v693
        %810 = vmatprep.subr.mxu0 %v698
        %811 = vmatpush1.msra.mxu0 %v697
        %812 = vmatprep.subr.mxu0 %v702
        %813 = vmatpush1.msra.mxu0 %v701
        %814 = vmatprep.subr.mxu0 %v706
        %815 = vmatpush1.msra.mxu0 %v705
        %816 = vmatprep.subr.mxu0 0.0
        %817 = vmatpush1.msra.mxu0 0.0
        %818 = vmatprep.subr.mxu0 0.0
        %819 = vmatpush1.msra.mxu0 0.0
        %820 = vmatprep.subr.mxu0 0.0
        %821 = vmatpush1.msra.mxu0 0.0
        %822 = vmatprep.subr.mxu0 0.0
        %823 = vmatpush1.msra.mxu0 0.0
        %824 = vmatprep.subr.mxu0 0.0
        %825 = vmatpush1.msra.mxu0 0.0
        %826 = vmatprep.subr.mxu0 0.0
        %827 = vmatpush1.msra.mxu0 0.0
        %828 = vmatprep.subr.mxu0 0.0
        %829 = vmatpush1.msra.mxu0 0.0
        %830 = vmatprep.subr.mxu0 0.0
        %831 = vmatpush1.msra.mxu0 0.0
        %832 = vmatprep.subr.mxu0 0.0
        %833 = vmatpush1.msra.mxu0 0.0
        %834 = vmatprep.subr.mxu0 0.0
        %835 = vmatpush1.msra.mxu0 0.0
        %836 = vmatprep.subr.mxu0 0.0
        %837 = vmatpush1.msra.mxu0 0.0
        %838 = vmatprep.subr.mxu0 0.0
        %839 = vmatpush1.msra.mxu0 0.0
        %840 = vmatprep.subr.mxu0 0.0
        %841 = vmatpush1.msra.mxu0 0.0
        %842 = vmatprep.subr.mxu0 0.0
        %843 = vmatpush1.msra.mxu0 0.0
        %844 = vmatprep.subr.mxu0 0.0
        %845 = vmatpush1.msra.mxu0 0.0
        %846 = vmatprep.subr.mxu0 0.0
        %847 = vmatpush1.msra.mxu0 0.0
        %848 = vmatprep.mubr.f32.mxu0 0.0
        %849 = vmatmul.mubr.f32.gmra.mrb[0].mxu0 %v707
        %v850 = vpop.f32.mrb[0].mxu0
        %v851 = vadd.f32 0.0, %v850
        %v852 = vpop.f32.mrb[0].mxu0
        %v853 = vadd.f32 0.0, %v852
        %854 = vdwg.mxu0
        %v855 = vadd.f32 %v709, %v780
        %v856 = vadd.f32 %v710, %v782
        %v857 = vadd.f32 %v711, %v851
        %v858 = vadd.f32 %v712, %v853
        %v859 = vxor.u32 %v855, 2147483648
        %v860 = vmul.f32 %v859, 1.442695
        %v861 = vpow.pop %v860
        %v862 = vadd.f32 %v861, 1.0
        %v863 = vrcp.pop %v862
        %v864 = vmul.f32 1.0, %v863
        %v865 = vxor.u32 %v856, 2147483648
        %v866 = vmul.f32 %v865, 1.442695
        %v867 = vpow.pop %v866
        %v868 = vadd.f32 %v867, 1.0
        %v869 = vrcp.pop %v868
        %v870 = vmul.f32 1.0, %v869
        %v871 = vtanh.pop %v857
        %v872 = vxor.u32 %v858, 2147483648
        %v873 = vmul.f32 %v872, 1.442695
        %v874 = vpow.pop %v873
        %v875 = vadd.f32 %v874, 1.0
        %v876 = vrcp.pop %v875
        %v877 = vmul.f32 1.0, %v876
        %v878 = vmul.f32 %v870, %v708
        %v879 = vmul.f32 %v864, %v871
        %v880 = vadd.f32 %v878, %v879
        %v881 = vtanh.pop %v880
        %v882 = vmul.f32 %v877, %v881
        %883 = vst [vmem:[%s306] sm:$0xff] %v882
        %v884 = vld [vmem:[#allocation2 + $0x20] sm:$0xff]
        %v885 = vld [vmem:[#allocation2 + $0x28] sm:$0xff]
        %v886 = vld [vmem:[#allocation2 + $0x30] sm:$0xff]
        %v887 = vld [vmem:[#allocation2 + $0x38] sm:$0xff]
        %888 = vmatprep.subr.mxu0 %v644
        %889 = vmatpush1.msra.mxu0 %v643
        %890 = vmatprep.subr.mxu0 %v648
        %891 = vmatpush1.msra.mxu0 %v647
        %892 = vmatprep.subr.mxu0 %v652
        %893 = vmatpush1.msra.mxu0 %v651
        %894 = vmatprep.subr.mxu0 %v656
        %895 = vmatpush1.msra.mxu0 %v655
        %896 = vmatprep.subr.mxu0 %v660
        %897 = vmatpush1.msra.mxu0 %v659
        %898 = vmatprep.subr.mxu0 %v664
        %899 = vmatpush1.msra.mxu0 %v663
        %900 = vmatprep.subr.mxu0 %v668
        %901 = vmatpush1.msra.mxu0 %v667
        %902 = vmatprep.subr.mxu0 %v672
        %903 = vmatpush1.msra.mxu0 %v671
        %904 = vmatprep.subr.mxu0 %v676
        %905 = vmatpush1.msra.mxu0 %v675
        %906 = vmatprep.subr.mxu0 %v680
        %907 = vmatpush1.msra.mxu0 %v679
        %908 = vmatprep.subr.mxu0 %v684
        %909 = vmatpush1.msra.mxu0 %v683
        %910 = vmatprep.subr.mxu0 %v688
        %911 = vmatpush1.msra.mxu0 %v687
        %912 = vmatprep.subr.mxu0 %v692
        %913 = vmatpush1.msra.mxu0 %v691
        %914 = vmatprep.subr.mxu0 %v696
        %915 = vmatpush1.msra.mxu0 %v695
        %916 = vmatprep.subr.mxu0 %v700
        %917 = vmatpush1.msra.mxu0 %v699
        %918 = vmatprep.subr.mxu0 %v704
        %919 = vmatpush1.msra.mxu0 %v703
        %920 = vmatprep.subr.mxu0 0.0
        %921 = vmatpush1.msra.mxu0 0.0
        %922 = vmatprep.subr.mxu0 0.0
        %923 = vmatpush1.msra.mxu0 0.0
        %924 = vmatprep.subr.mxu0 0.0
        %925 = vmatpush1.msra.mxu0 0.0
        %926 = vmatprep.subr.mxu0 0.0
        %927 = vmatpush1.msra.mxu0 0.0
        %928 = vmatprep.subr.mxu0 0.0
        %929 = vmatpush1.msra.mxu0 0.0
        %930 = vmatprep.subr.mxu0 0.0
        %931 = vmatpush1.msra.mxu0 0.0
        %932 = vmatprep.subr.mxu0 0.0
        %933 = vmatpush1.msra.mxu0 0.0
        %934 = vmatprep.subr.mxu0 0.0
        %935 = vmatpush1.msra.mxu0 0.0
        %936 = vmatprep.subr.mxu0 0.0
        %937 = vmatpush1.msra.mxu0 0.0
        %938 = vmatprep.subr.mxu0 0.0
        %939 = vmatpush1.msra.mxu0 0.0
        %940 = vmatprep.subr.mxu0 0.0
        %941 = vmatpush1.msra.mxu0 0.0
        %942 = vmatprep.subr.mxu0 0.0
        %943 = vmatpush1.msra.mxu0 0.0
        %944 = vmatprep.subr.mxu0 0.0
        %945 = vmatpush1.msra.mxu0 0.0
        %946 = vmatprep.subr.mxu0 0.0
        %947 = vmatpush1.msra.mxu0 0.0
        %948 = vmatprep.subr.mxu0 0.0
        %949 = vmatpush1.msra.mxu0 0.0
        %950 = vmatprep.subr.mxu0 0.0
        %951 = vmatpush1.msra.mxu0 0.0
        %952 = vmatprep.mubr.f32.mxu0 0.0
        %953 = vmatmul.mubr.f32.gmra.mrb[0].mxu0 %v882
        %v954 = vpop.f32.mrb[0].mxu0
        %v955 = vadd.f32 0.0, %v954
        %v956 = vpop.f32.mrb[0].mxu0
        %v957 = vadd.f32 0.0, %v956
        %958 = vdwg.mxu0
        %959 = vmatprep.subr.mxu0 %v646
        %960 = vmatpush1.msra.mxu0 %v645
        %961 = vmatprep.subr.mxu0 %v650
        %962 = vmatpush1.msra.mxu0 %v649
        %963 = vmatprep.subr.mxu0 %v654
        %964 = vmatpush1.msra.mxu0 %v653
        %965 = vmatprep.subr.mxu0 %v658
        %966 = vmatpush1.msra.mxu0 %v657
        %967 = vmatprep.subr.mxu0 %v662
        %968 = vmatpush1.msra.mxu0 %v661
        %969 = vmatprep.subr.mxu0 %v666
        %970 = vmatpush1.msra.mxu0 %v665
        %971 = vmatprep.subr.mxu0 %v670
        %972 = vmatpush1.msra.mxu0 %v669
        %973 = vmatprep.subr.mxu0 %v674
        %974 = vmatpush1.msra.mxu0 %v673
        %975 = vmatprep.subr.mxu0 %v678
        %976 = vmatpush1.msra.mxu0 %v677
        %977 = vmatprep.subr.mxu0 %v682
        %978 = vmatpush1.msra.mxu0 %v681
        %979 = vmatprep.subr.mxu0 %v686
        %980 = vmatpush1.msra.mxu0 %v685
        %981 = vmatprep.subr.mxu0 %v690
        %982 = vmatpush1.msra.mxu0 %v689
        %983 = vmatprep.subr.mxu0 %v694
        %984 = vmatpush1.msra.mxu0 %v693
        %985 = vmatprep.subr.mxu0 %v698
        %986 = vmatpush1.msra.mxu0 %v697
        %987 = vmatprep.subr.mxu0 %v702
        %988 = vmatpush1.msra.mxu0 %v701
        %989 = vmatprep.subr.mxu0 %v706
        %990 = vmatpush1.msra.mxu0 %v705
        %991 = vmatprep.subr.mxu0 0.0
        %992 = vmatpush1.msra.mxu0 0.0
        %993 = vmatprep.subr.mxu0 0.0
        %994 = vmatpush1.msra.mxu0 0.0
        %995 = vmatprep.subr.mxu0 0.0
        %996 = vmatpush1.msra.mxu0 0.0
        %997 = vmatprep.subr.mxu0 0.0
        %998 = vmatpush1.msra.mxu0 0.0
        %999 = vmatprep.subr.mxu0 0.0
        %1000 = vmatpush1.msra.mxu0 0.0
        %1001 = vmatprep.subr.mxu0 0.0
        %1002 = vmatpush1.msra.mxu0 0.0
        %1003 = vmatprep.subr.mxu0 0.0
        %1004 = vmatpush1.msra.mxu0 0.0
        %1005 = vmatprep.subr.mxu0 0.0
        %1006 = vmatpush1.msra.mxu0 0.0
        %1007 = vmatprep.subr.mxu0 0.0
        %1008 = vmatpush1.msra.mxu0 0.0
        %1009 = vmatprep.subr.mxu0 0.0
        %1010 = vmatpush1.msra.mxu0 0.0
        %1011 = vmatprep.subr.mxu0 0.0
        %1012 = vmatpush1.msra.mxu0 0.0
        %1013 = vmatprep.subr.mxu0 0.0
        %1014 = vmatpush1.msra.mxu0 0.0
        %1015 = vmatprep.subr.mxu0 0.0
        %1016 = vmatpush1.msra.mxu0 0.0
        %1017 = vmatprep.subr.mxu0 0.0
        %1018 = vmatpush1.msra.mxu0 0.0
        %1019 = vmatprep.subr.mxu0 0.0
        %1020 = vmatpush1.msra.mxu0 0.0
        %1021 = vmatprep.subr.mxu0 0.0
        %1022 = vmatpush1.msra.mxu0 0.0
        %1023 = vmatprep.mubr.f32.mxu0 0.0
        %1024 = vmatmul.mubr.f32.gmra.mrb[0].mxu0 %v882
        %v1025 = vpop.f32.mrb[0].mxu0
        %v1026 = vadd.f32 0.0, %v1025
        %v1027 = vpop.f32.mrb[0].mxu0
        %v1028 = vadd.f32 0.0, %v1027
        %1029 = vdwg.mxu0
        %v1030 = vadd.f32 %v884, %v955
        %v1031 = vadd.f32 %v885, %v957
        %v1032 = vadd.f32 %v886, %v1026
        %v1033 = vadd.f32 %v887, %v1028
        %v1034 = vxor.u32 %v1030, 2147483648
        %v1035 = vmul.f32 %v1034, 1.442695
        %v1036 = vpow.pop %v1035
        %v1037 = vadd.f32 %v1036, 1.0
        %v1038 = vrcp.pop %v1037
        %v1039 = vmul.f32 1.0, %v1038
        %v1040 = vxor.u32 %v1031, 2147483648
        %v1041 = vmul.f32 %v1040, 1.442695
        %v1042 = vpow.pop %v1041
        %v1043 = vadd.f32 %v1042, 1.0
        %v1044 = vrcp.pop %v1043
        %v1045 = vmul.f32 1.0, %v1044
        %v1046 = vtanh.pop %v1032
        %v1047 = vxor.u32 %v1033, 2147483648
        %v1048 = vmul.f32 %v1047, 1.442695
        %v1049 = vpow.pop %v1048
        %v1050 = vadd.f32 %v1049, 1.0
        %v1051 = vrcp.pop %v1050
        %v1052 = vmul.f32 1.0, %v1051
        %v1053 = vmul.f32 %v1045, %v880
        %v1054 = vmul.f32 %v1039, %v1046
        %v1055 = vadd.f32 %v1053, %v1054
        %v1056 = vtanh.pop %v1055
        %v1057 = vmul.f32 %v1052, %v1056
        %1058 = vst [vmem:[%s306 + $0x8] sm:$0xff] %v1057
        %v1059 = vld [vmem:[#allocation2 + $0x40] sm:$0xff]
        %v1060 = vld [vmem:[#allocation2 + $0x48] sm:$0xff]
        %v1061 = vld [vmem:[#allocation2 + $0x50] sm:$0xff]
        %v1062 = vld [vmem:[#allocation2 + $0x58] sm:$0xff]
        %1063 = vmatprep.subr.mxu0 %v644
        %1064 = vmatpush1.msra.mxu0 %v643
        %1065 = vmatprep.subr.mxu0 %v648
        %1066 = vmatpush1.msra.mxu0 %v647
        %1067 = vmatprep.subr.mxu0 %v652
        %1068 = vmatpush1.msra.mxu0 %v651
        %1069 = vmatprep.subr.mxu0 %v656
        %1070 = vmatpush1.msra.mxu0 %v655
        %1071 = vmatprep.subr.mxu0 %v660
        %1072 = vmatpush1.msra.mxu0 %v659
        %1073 = vmatprep.subr.mxu0 %v664
        %1074 = vmatpush1.msra.mxu0 %v663
        %1075 = vmatprep.subr.mxu0 %v668
        %1076 = vmatpush1.msra.mxu0 %v667
        %1077 = vmatprep.subr.mxu0 %v672
        %1078 = vmatpush1.msra.mxu0 %v671
        %1079 = vmatprep.subr.mxu0 %v676
        %1080 = vmatpush1.msra.mxu0 %v675
        %1081 = vmatprep.subr.mxu0 %v680
        %1082 = vmatpush1.msra.mxu0 %v679
        %1083 = vmatprep.subr.mxu0 %v684
        %1084 = vmatpush1.msra.mxu0 %v683
        %1085 = vmatprep.subr.mxu0 %v688
        %1086 = vmatpush1.msra.mxu0 %v687
        %1087 = vmatprep.subr.mxu0 %v692
        %1088 = vmatpush1.msra.mxu0 %v691
        %1089 = vmatprep.subr.mxu0 %v696
        %1090 = vmatpush1.msra.mxu0 %v695
        %1091 = vmatprep.subr.mxu0 %v700
        %1092 = vmatpush1.msra.mxu0 %v699
        %1093 = vmatprep.subr.mxu0 %v704
        %1094 = vmatpush1.msra.mxu0 %v703
        %1095 = vmatprep.subr.mxu0 0.0
        %1096 = vmatpush1.msra.mxu0 0.0
        %1097 = vmatprep.subr.mxu0 0.0
        %1098 = vmatpush1.msra.mxu0 0.0
        %1099 = vmatprep.subr.mxu0 0.0
        %1100 = vmatpush1.msra.mxu0 0.0
        %1101 = vmatprep.subr.mxu0 0.0
        %1102 = vmatpush1.msra.mxu0 0.0
        %1103 = vmatprep.subr.mxu0 0.0
        %1104 = vmatpush1.msra.mxu0 0.0
        %1105 = vmatprep.subr.mxu0 0.0
        %1106 = vmatpush1.msra.mxu0 0.0
        %1107 = vmatprep.subr.mxu0 0.0
        %1108 = vmatpush1.msra.mxu0 0.0
        %1109 = vmatprep.subr.mxu0 0.0
        %1110 = vmatpush1.msra.mxu0 0.0
        %1111 = vmatprep.subr.mxu0 0.0
        %1112 = vmatpush1.msra.mxu0 0.0
        %1113 = vmatprep.subr.mxu0 0.0
        %1114 = vmatpush1.msra.mxu0 0.0
        %1115 = vmatprep.subr.mxu0 0.0
        %1116 = vmatpush1.msra.mxu0 0.0
        %1117 = vmatprep.subr.mxu0 0.0
        %1118 = vmatpush1.msra.mxu0 0.0
        %1119 = vmatprep.subr.mxu0 0.0
        %1120 = vmatpush1.msra.mxu0 0.0
        %1121 = vmatprep.subr.mxu0 0.0
        %1122 = vmatpush1.msra.mxu0 0.0
        %1123 = vmatprep.subr.mxu0 0.0
        %1124 = vmatpush1.msra.mxu0 0.0
        %1125 = vmatprep.subr.mxu0 0.0
        %1126 = vmatpush1.msra.mxu0 0.0
        %1127 = vmatprep.mubr.f32.mxu0 0.0
        %1128 = vmatmul.mubr.f32.gmra.mrb[0].mxu0 %v1057
        %v1129 = vpop.f32.mrb[0].mxu0
        %v1130 = vadd.f32 0.0, %v1129
        %v1131 = vpop.f32.mrb[0].mxu0
        %v1132 = vadd.f32 0.0, %v1131
        %1133 = vdwg.mxu0
        %1134 = vmatprep.subr.mxu0 %v646
        %1135 = vmatpush1.msra.mxu0 %v645
        %1136 = vmatprep.subr.mxu0 %v650
        %1137 = vmatpush1.msra.mxu0 %v649
        %1138 = vmatprep.subr.mxu0 %v654
        %1139 = vmatpush1.msra.mxu0 %v653
        %1140 = vmatprep.subr.mxu0 %v658
        %1141 = vmatpush1.msra.mxu0 %v657
        %1142 = vmatprep.subr.mxu0 %v662
        %1143 = vmatpush1.msra.mxu0 %v661
        %1144 = vmatprep.subr.mxu0 %v666
        %1145 = vmatpush1.msra.mxu0 %v665
        %1146 = vmatprep.subr.mxu0 %v670
        %1147 = vmatpush1.msra.mxu0 %v669
        %1148 = vmatprep.subr.mxu0 %v674
        %1149 = vmatpush1.msra.mxu0 %v673
        %1150 = vmatprep.subr.mxu0 %v678
        %1151 = vmatpush1.msra.mxu0 %v677
        %1152 = vmatprep.subr.mxu0 %v682
        %1153 = vmatpush1.msra.mxu0 %v681
        %1154 = vmatprep.subr.mxu0 %v686
        %1155 = vmatpush1.msra.mxu0 %v685
        %1156 = vmatprep.subr.mxu0 %v690
        %1157 = vmatpush1.msra.mxu0 %v689
        %1158 = vmatprep.subr.mxu0 %v694
        %1159 = vmatpush1.msra.mxu0 %v693
        %1160 = vmatprep.subr.mxu0 %v698
        %1161 = vmatpush1.msra.mxu0 %v697
        %1162 = vmatprep.subr.mxu0 %v702
        %1163 = vmatpush1.msra.mxu0 %v701
        %1164 = vmatprep.subr.mxu0 %v706
        %1165 = vmatpush1.msra.mxu0 %v705
        %1166 = vmatprep.subr.mxu0 0.0
        %1167 = vmatpush1.msra.mxu0 0.0
        %1168 = vmatprep.subr.mxu0 0.0
        %1169 = vmatpush1.msra.mxu0 0.0
        %1170 = vmatprep.subr.mxu0 0.0
        %1171 = vmatpush1.msra.mxu0 0.0
        %1172 = vmatprep.subr.mxu0 0.0
        %1173 = vmatpush1.msra.mxu0 0.0
        %1174 = vmatprep.subr.mxu0 0.0
        %1175 = vmatpush1.msra.mxu0 0.0
        %1176 = vmatprep.subr.mxu0 0.0
        %1177 = vmatpush1.msra.mxu0 0.0
        %1178 = vmatprep.subr.mxu0 0.0
        %1179 = vmatpush1.msra.mxu0 0.0
        %1180 = vmatprep.subr.mxu0 0.0
        %1181 = vmatpush1.msra.mxu0 0.0
        %1182 = vmatprep.subr.mxu0 0.0
        %1183 = vmatpush1.msra.mxu0 0.0
        %1184 = vmatprep.subr.mxu0 0.0
        %1185 = vmatpush1.msra.mxu0 0.0
        %1186 = vmatprep.subr.mxu0 0.0
        %1187 = vmatpush1.msra.mxu0 0.0
        %1188 = vmatprep.subr.mxu0 0.0
        %1189 = vmatpush1.msra.mxu0 0.0
        %1190 = vmatprep.subr.mxu0 0.0
        %1191 = vmatpush1.msra.mxu0 0.0
        %1192 = vmatprep.subr.mxu0 0.0
        %1193 = vmatpush1.msra.mxu0 0.0
        %1194 = vmatprep.subr.mxu0 0.0
        %1195 = vmatpush1.msra.mxu0 0.0
        %1196 = vmatprep.subr.mxu0 0.0
        %1197 = vmatpush1.msra.mxu0 0.0
        %1198 = vmatprep.mubr.f32.mxu0 0.0
        %1199 = vmatmul.mubr.f32.gmra.mrb[0].mxu0 %v1057
        %v1200 = vpop.f32.mrb[0].mxu0
        %v1201 = vadd.f32 0.0, %v1200
        %v1202 = vpop.f32.mrb[0].mxu0
        %v1203 = vadd.f32 0.0, %v1202
        %1204 = vdwg.mxu0
        %v1205 = vadd.f32 %v1059, %v1130
        %v1206 = vadd.f32 %v1060, %v1132
        %v1207 = vadd.f32 %v1061, %v1201
        %v1208 = vadd.f32 %v1062, %v1203
        %v1209 = vxor.u32 %v1205, 2147483648
        %v1210 = vmul.f32 %v1209, 1.442695
        %v1211 = vpow.pop %v1210
        %v1212 = vadd.f32 %v1211, 1.0
        %v1213 = vrcp.pop %v1212
        %v1214 = vmul.f32 1.0, %v1213
        %v1215 = vxor.u32 %v1206, 2147483648
        %v1216 = vmul.f32 %v1215, 1.442695
        %v1217 = vpow.pop %v1216
        %v1218 = vadd.f32 %v1217, 1.0
        %v1219 = vrcp.pop %v1218
        %v1220 = vmul.f32 1.0, %v1219
        %v1221 = vtanh.pop %v1207
        %v1222 = vxor.u32 %v1208, 2147483648
        %v1223 = vmul.f32 %v1222, 1.442695
        %v1224 = vpow.pop %v1223
        %v1225 = vadd.f32 %v1224, 1.0
        %v1226 = vrcp.pop %v1225
        %v1227 = vmul.f32 1.0, %v1226
        %v1228 = vmul.f32 %v1220, %v1055
        %v1229 = vmul.f32 %v1214, %v1221
        %v1230 = vadd.f32 %v1228, %v1229
        %v1231 = vtanh.pop %v1230
        %v1232 = vmul.f32 %v1227, %v1231
        %1233 = vst [vmem:[%s306 + $0x10] sm:$0xff] %v1232
        %v1234 = vld [vmem:[#allocation2 + $0x60] sm:$0xff]
        %v1235 = vld [vmem:[#allocation2 + $0x68] sm:$0xff]
        %v1236 = vld [vmem:[#allocation2 + $0x70] sm:$0xff]
        %v1237 = vld [vmem:[#allocation2 + $0x78] sm:$0xff]
        %1238 = vmatprep.subr.mxu0 %v644
        %1239 = vmatpush1.msra.mxu0 %v643
        %1240 = vmatprep.subr.mxu0 %v648
        %1241 = vmatpush1.msra.mxu0 %v647
        %1242 = vmatprep.subr.mxu0 %v652
        %1243 = vmatpush1.msra.mxu0 %v651
        %1244 = vmatprep.subr.mxu0 %v656
        %1245 = vmatpush1.msra.mxu0 %v655
        %1246 = vmatprep.subr.mxu0 %v660
        %1247 = vmatpush1.msra.mxu0 %v659
        %1248 = vmatprep.subr.mxu0 %v664
        %1249 = vmatpush1.msra.mxu0 %v663
        %1250 = vmatprep.subr.mxu0 %v668
        %1251 = vmatpush1.msra.mxu0 %v667
        %1252 = vmatprep.subr.mxu0 %v672
        %1253 = vmatpush1.msra.mxu0 %v671
        %1254 = vmatprep.subr.mxu0 %v676
        %1255 = vmatpush1.msra.mxu0 %v675
        %1256 = vmatprep.subr.mxu0 %v680
        %1257 = vmatpush1.msra.mxu0 %v679
        %1258 = vmatprep.subr.mxu0 %v684
        %1259 = vmatpush1.msra.mxu0 %v683
        %1260 = vmatprep.subr.mxu0 %v688
        %1261 = vmatpush1.msra.mxu0 %v687
        %1262 = vmatprep.subr.mxu0 %v692
        %1263 = vmatpush1.msra.mxu0 %v691
        %1264 = vmatprep.subr.mxu0 %v696
        %1265 = vmatpush1.msra.mxu0 %v695
        %1266 = vmatprep.subr.mxu0 %v700
        %1267 = vmatpush1.msra.mxu0 %v699
        %1268 = vmatprep.subr.mxu0 %v704
        %1269 = vmatpush1.msra.mxu0 %v703
        %1270 = vmatprep.subr.mxu0 0.0
        %1271 = vmatpush1.msra.mxu0 0.0
        %1272 = vmatprep.subr.mxu0 0.0
        %1273 = vmatpush1.msra.mxu0 0.0
        %1274 = vmatprep.subr.mxu0 0.0
        %1275 = vmatpush1.msra.mxu0 0.0
        %1276 = vmatprep.subr.mxu0 0.0
        %1277 = vmatpush1.msra.mxu0 0.0
        %1278 = vmatprep.subr.mxu0 0.0
        %1279 = vmatpush1.msra.mxu0 0.0
        %1280 = vmatprep.subr.mxu0 0.0
        %1281 = vmatpush1.msra.mxu0 0.0
        %1282 = vmatprep.subr.mxu0 0.0
        %1283 = vmatpush1.msra.mxu0 0.0
        %1284 = vmatprep.subr.mxu0 0.0
        %1285 = vmatpush1.msra.mxu0 0.0
        %1286 = vmatprep.subr.mxu0 0.0
        %1287 = vmatpush1.msra.mxu0 0.0
        %1288 = vmatprep.subr.mxu0 0.0
        %1289 = vmatpush1.msra.mxu0 0.0
        %1290 = vmatprep.subr.mxu0 0.0
        %1291 = vmatpush1.msra.mxu0 0.0
        %1292 = vmatprep.subr.mxu0 0.0
        %1293 = vmatpush1.msra.mxu0 0.0
        %1294 = vmatprep.subr.mxu0 0.0
        %1295 = vmatpush1.msra.mxu0 0.0
        %1296 = vmatprep.subr.mxu0 0.0
        %1297 = vmatpush1.msra.mxu0 0.0
        %1298 = vmatprep.subr.mxu0 0.0
        %1299 = vmatpush1.msra.mxu0 0.0
        %1300 = vmatprep.subr.mxu0 0.0
        %1301 = vmatpush1.msra.mxu0 0.0
        %1302 = vmatprep.mubr.f32.mxu0 0.0
        %1303 = vmatmul.mubr.f32.gmra.mrb[0].mxu0 %v1232
        %v1304 = vpop.f32.mrb[0].mxu0
        %v1305 = vadd.f32 0.0, %v1304
        %v1306 = vpop.f32.mrb[0].mxu0
        %v1307 = vadd.f32 0.0, %v1306
        %1308 = vdwg.mxu0
        %1309 = vmatprep.subr.mxu0 %v646
        %1310 = vmatpush1.msra.mxu0 %v645
        %1311 = vmatprep.subr.mxu0 %v650
        %1312 = vmatpush1.msra.mxu0 %v649
        %1313 = vmatprep.subr.mxu0 %v654
        %1314 = vmatpush1.msra.mxu0 %v653
        %1315 = vmatprep.subr.mxu0 %v658
        %1316 = vmatpush1.msra.mxu0 %v657
        %1317 = vmatprep.subr.mxu0 %v662
        %1318 = vmatpush1.msra.mxu0 %v661
        %1319 = vmatprep.subr.mxu0 %v666
        %1320 = vmatpush1.msra.mxu0 %v665
        %1321 = vmatprep.subr.mxu0 %v670
        %1322 = vmatpush1.msra.mxu0 %v669
        %1323 = vmatprep.subr.mxu0 %v674
        %1324 = vmatpush1.msra.mxu0 %v673
        %1325 = vmatprep.subr.mxu0 %v678
        %1326 = vmatpush1.msra.mxu0 %v677
        %1327 = vmatprep.subr.mxu0 %v682
        %1328 = vmatpush1.msra.mxu0 %v681
        %1329 = vmatprep.subr.mxu0 %v686
        %1330 = vmatpush1.msra.mxu0 %v685
        %1331 = vmatprep.subr.mxu0 %v690
        %1332 = vmatpush1.msra.mxu0 %v689
        %1333 = vmatprep.subr.mxu0 %v694
        %1334 = vmatpush1.msra.mxu0 %v693
        %1335 = vmatprep.subr.mxu0 %v698
        %1336 = vmatpush1.msra.mxu0 %v697
        %1337 = vmatprep.subr.mxu0 %v702
        %1338 = vmatpush1.msra.mxu0 %v701
        %1339 = vmatprep.subr.mxu0 %v706
        %1340 = vmatpush1.msra.mxu0 %v705
        %1341 = vmatprep.subr.mxu0 0.0
        %1342 = vmatpush1.msra.mxu0 0.0
        %1343 = vmatprep.subr.mxu0 0.0
        %1344 = vmatpush1.msra.mxu0 0.0
        %1345 = vmatprep.subr.mxu0 0.0
        %1346 = vmatpush1.msra.mxu0 0.0
        %1347 = vmatprep.subr.mxu0 0.0
        %1348 = vmatpush1.msra.mxu0 0.0
        %1349 = vmatprep.subr.mxu0 0.0
        %1350 = vmatpush1.msra.mxu0 0.0
        %1351 = vmatprep.subr.mxu0 0.0
        %1352 = vmatpush1.msra.mxu0 0.0
        %1353 = vmatprep.subr.mxu0 0.0
        %1354 = vmatpush1.msra.mxu0 0.0
        %1355 = vmatprep.subr.mxu0 0.0
        %1356 = vmatpush1.msra.mxu0 0.0
        %1357 = vmatprep.subr.mxu0 0.0
        %1358 = vmatpush1.msra.mxu0 0.0
        %1359 = vmatprep.subr.mxu0 0.0
        %1360 = vmatpush1.msra.mxu0 0.0
        %1361 = vmatprep.subr.mxu0 0.0
        %1362 = vmatpush1.msra.mxu0 0.0
        %1363 = vmatprep.subr.mxu0 0.0
        %1364 = vmatpush1.msra.mxu0 0.0
        %1365 = vmatprep.subr.mxu0 0.0
        %1366 = vmatpush1.msra.mxu0 0.0
        %1367 = vmatprep.subr.mxu0 0.0
        %1368 = vmatpush1.msra.mxu0 0.0
        %1369 = vmatprep.subr.mxu0 0.0
        %1370 = vmatpush1.msra.mxu0 0.0
        %1371 = vmatprep.subr.mxu0 0.0
        %1372 = vmatpush1.msra.mxu0 0.0
        %1373 = vmatprep.mubr.f32.mxu0 0.0
        %1374 = vmatmul.mubr.f32.gmra.mrb[0].mxu0 %v1232
        %v1375 = vpop.f32.mrb[0].mxu0
        %v1376 = vadd.f32 0.0, %v1375
        %v1377 = vpop.f32.mrb[0].mxu0
        %v1378 = vadd.f32 0.0, %v1377
        %1379 = vdwg.mxu0
        %v1380 = vadd.f32 %v1234, %v1305
        %v1381 = vadd.f32 %v1235, %v1307
        %v1382 = vadd.f32 %v1236, %v1376
        %v1383 = vadd.f32 %v1237, %v1378
        %v1384 = vxor.u32 %v1380, 2147483648
        %v1385 = vmul.f32 %v1384, 1.442695
        %v1386 = vpow.pop %v1385
        %v1387 = vadd.f32 %v1386, 1.0
        %v1388 = vrcp.pop %v1387
        %v1389 = vmul.f32 1.0, %v1388
        %v1390 = vxor.u32 %v1381, 2147483648
        %v1391 = vmul.f32 %v1390, 1.442695
        %v1392 = vpow.pop %v1391
        %v1393 = vadd.f32 %v1392, 1.0
        %v1394 = vrcp.pop %v1393
        %v1395 = vmul.f32 1.0, %v1394
        %v1396 = vtanh.pop %v1382
        %v1397 = vxor.u32 %v1383, 2147483648
        %v1398 = vmul.f32 %v1397, 1.442695
        %v1399 = vpow.pop %v1398
        %v1400 = vadd.f32 %v1399, 1.0
        %v1401 = vrcp.pop %v1400
        %v1402 = vmul.f32 1.0, %v1401
        %v1403 = vmul.f32 %v1395, %v1230
        %v1404 = vmul.f32 %v1389, %v1396
        %v1405 = vadd.f32 %v1403, %v1404
        %v1406 = vtanh.pop %v1405
        %v1407 = vmul.f32 %v1402, %v1406
        %1408 = vst [vmem:[%s306 + $0x18] sm:$0xff] %v1407
        %v1409 = vld [vmem:[#allocation2 + $0x80] sm:$0xff]
        %v1410 = vld [vmem:[#allocation2 + $0x88] sm:$0xff]
        %v1411 = vld [vmem:[#allocation2 + $0x90] sm:$0xff]
        %v1412 = vld [vmem:[#allocation2 + $0x98] sm:$0xff]
        %1413 = vmatprep.subr.mxu0 %v644
        %1414 = vmatpush1.msra.mxu0 %v643
        %1415 = vmatprep.subr.mxu0 %v648
        %1416 = vmatpush1.msra.mxu0 %v647
        %1417 = vmatprep.subr.mxu0 %v652
        %1418 = vmatpush1.msra.mxu0 %v651
        %1419 = vmatprep.subr.mxu0 %v656
        %1420 = vmatpush1.msra.mxu0 %v655
        %1421 = vmatprep.subr.mxu0 %v660
        %1422 = vmatpush1.msra.mxu0 %v659
        %1423 = vmatprep.subr.mxu0 %v664
        %1424 = vmatpush1.msra.mxu0 %v663
        %1425 = vmatprep.subr.mxu0 %v668
        %1426 = vmatpush1.msra.mxu0 %v667
        %1427 = vmatprep.subr.mxu0 %v672
        %1428 = vmatpush1.msra.mxu0 %v671
        %1429 = vmatprep.subr.mxu0 %v676
        %1430 = vmatpush1.msra.mxu0 %v675
        %1431 = vmatprep.subr.mxu0 %v680
        %1432 = vmatpush1.msra.mxu0 %v679
        %1433 = vmatprep.subr.mxu0 %v684
        %1434 = vmatpush1.msra.mxu0 %v683
        %1435 = vmatprep.subr.mxu0 %v688
        %1436 = vmatpush1.msra.mxu0 %v687
        %1437 = vmatprep.subr.mxu0 %v692
        %1438 = vmatpush1.msra.mxu0 %v691
        %1439 = vmatprep.subr.mxu0 %v696
        %1440 = vmatpush1.msra.mxu0 %v695
        %1441 = vmatprep.subr.mxu0 %v700
        %1442 = vmatpush1.msra.mxu0 %v699
        %1443 = vmatprep.subr.mxu0 %v704
        %1444 = vmatpush1.msra.mxu0 %v703
        %1445 = vmatprep.subr.mxu0 0.0
        %1446 = vmatpush1.msra.mxu0 0.0
        %1447 = vmatprep.subr.mxu0 0.0
        %1448 = vmatpush1.msra.mxu0 0.0
        %1449 = vmatprep.subr.mxu0 0.0
        %1450 = vmatpush1.msra.mxu0 0.0
        %1451 = vmatprep.subr.mxu0 0.0
        %1452 = vmatpush1.msra.mxu0 0.0
        %1453 = vmatprep.subr.mxu0 0.0
        %1454 = vmatpush1.msra.mxu0 0.0
        %1455 = vmatprep.subr.mxu0 0.0
        %1456 = vmatpush1.msra.mxu0 0.0
        %1457 = vmatprep.subr.mxu0 0.0
        %1458 = vmatpush1.msra.mxu0 0.0
        %1459 = vmatprep.subr.mxu0 0.0
        %1460 = vmatpush1.msra.mxu0 0.0
        %1461 = vmatprep.subr.mxu0 0.0
        %1462 = vmatpush1.msra.mxu0 0.0
        %1463 = vmatprep.subr.mxu0 0.0
        %1464 = vmatpush1.msra.mxu0 0.0
        %1465 = vmatprep.subr.mxu0 0.0
        %1466 = vmatpush1.msra.mxu0 0.0
        %1467 = vmatprep.subr.mxu0 0.0
        %1468 = vmatpush1.msra.mxu0 0.0
        %1469 = vmatprep.subr.mxu0 0.0
        %1470 = vmatpush1.msra.mxu0 0.0
        %1471 = vmatprep.subr.mxu0 0.0
        %1472 = vmatpush1.msra.mxu0 0.0
        %1473 = vmatprep.subr.mxu0 0.0
        %1474 = vmatpush1.msra.mxu0 0.0
        %1475 = vmatprep.subr.mxu0 0.0
        %1476 = vmatpush1.msra.mxu0 0.0
        %1477 = vmatprep.mubr.f32.mxu0 0.0
        %1478 = vmatmul.mubr.f32.gmra.mrb[0].mxu0 %v1407
        %v1479 = vpop.f32.mrb[0].mxu0
        %v1480 = vadd.f32 0.0, %v1479
        %v1481 = vpop.f32.mrb[0].mxu0
        %v1482 = vadd.f32 0.0, %v1481
        %1483 = vdwg.mxu0
        %1484 = vmatprep.subr.mxu0 %v646
        %1485 = vmatpush1.msra.mxu0 %v645
        %1486 = vmatprep.subr.mxu0 %v650
        %1487 = vmatpush1.msra.mxu0 %v649
        %1488 = vmatprep.subr.mxu0 %v654
        %1489 = vmatpush1.msra.mxu0 %v653
        %1490 = vmatprep.subr.mxu0 %v658
        %1491 = vmatpush1.msra.mxu0 %v657
        %1492 = vmatprep.subr.mxu0 %v662
        %1493 = vmatpush1.msra.mxu0 %v661
        %1494 = vmatprep.subr.mxu0 %v666
        %1495 = vmatpush1.msra.mxu0 %v665
        %1496 = vmatprep.subr.mxu0 %v670
        %1497 = vmatpush1.msra.mxu0 %v669
        %1498 = vmatprep.subr.mxu0 %v674
        %1499 = vmatpush1.msra.mxu0 %v673
        %1500 = vmatprep.subr.mxu0 %v678
        %1501 = vmatpush1.msra.mxu0 %v677
        %1502 = vmatprep.subr.mxu0 %v682
        %1503 = vmatpush1.msra.mxu0 %v681
        %1504 = vmatprep.subr.mxu0 %v686
        %1505 = vmatpush1.msra.mxu0 %v685
        %1506 = vmatprep.subr.mxu0 %v690
        %1507 = vmatpush1.msra.mxu0 %v689
        %1508 = vmatprep.subr.mxu0 %v694
        %1509 = vmatpush1.msra.mxu0 %v693
        %1510 = vmatprep.subr.mxu0 %v698
        %1511 = vmatpush1.msra.mxu0 %v697
        %1512 = vmatprep.subr.mxu0 %v702
        %1513 = vmatpush1.msra.mxu0 %v701
        %1514 = vmatprep.subr.mxu0 %v706
        %1515 = vmatpush1.msra.mxu0 %v705
        %1516 = vmatprep.subr.mxu0 0.0
        %1517 = vmatpush1.msra.mxu0 0.0
        %1518 = vmatprep.subr.mxu0 0.0
        %1519 = vmatpush1.msra.mxu0 0.0
        %1520 = vmatprep.subr.mxu0 0.0
        %1521 = vmatpush1.msra.mxu0 0.0
        %1522 = vmatprep.subr.mxu0 0.0
        %1523 = vmatpush1.msra.mxu0 0.0
        %1524 = vmatprep.subr.mxu0 0.0
        %1525 = vmatpush1.msra.mxu0 0.0
        %1526 = vmatprep.subr.mxu0 0.0
        %1527 = vmatpush1.msra.mxu0 0.0
        %1528 = vmatprep.subr.mxu0 0.0
        %1529 = vmatpush1.msra.mxu0 0.0
        %1530 = vmatprep.subr.mxu0 0.0
        %1531 = vmatpush1.msra.mxu0 0.0
        %1532 = vmatprep.subr.mxu0 0.0
        %1533 = vmatpush1.msra.mxu0 0.0
        %1534 = vmatprep.subr.mxu0 0.0
        %1535 = vmatpush1.msra.mxu0 0.0
        %1536 = vmatprep.subr.mxu0 0.0
        %1537 = vmatpush1.msra.mxu0 0.0
        %1538 = vmatprep.subr.mxu0 0.0
        %1539 = vmatpush1.msra.mxu0 0.0
        %1540 = vmatprep.subr.mxu0 0.0
        %1541 = vmatpush1.msra.mxu0 0.0
        %1542 = vmatprep.subr.mxu0 0.0
        %1543 = vmatpush1.msra.mxu0 0.0
        %1544 = vmatprep.subr.mxu0 0.0
        %1545 = vmatpush1.msra.mxu0 0.0
        %1546 = vmatprep.subr.mxu0 0.0
        %1547 = vmatpush1.msra.mxu0 0.0
        %1548 = vmatprep.mubr.f32.mxu0 0.0
        %1549 = vmatmul.mubr.f32.gmra.mrb[0].mxu0 %v1407
        %v1550 = vpop.f32.mrb[0].mxu0
        %v1551 = vadd.f32 0.0, %v1550
        %v1552 = vpop.f32.mrb[0].mxu0
        %v1553 = vadd.f32 0.0, %v1552
        %1554 = vdwg.mxu0
        %v1555 = vadd.f32 %v1409, %v1480
        %v1556 = vadd.f32 %v1410, %v1482
        %v1557 = vadd.f32 %v1411, %v1551
        %v1558 = vadd.f32 %v1412, %v1553
        %v1559 = vxor.u32 %v1555, 2147483648
        %v1560 = vmul.f32 %v1559, 1.442695
        %v1561 = vpow.pop %v1560
        %v1562 = vadd.f32 %v1561, 1.0
        %v1563 = vrcp.pop %v1562
        %v1564 = vmul.f32 1.0, %v1563
        %v1565 = vxor.u32 %v1556, 2147483648
        %v1566 = vmul.f32 %v1565, 1.442695
        %v1567 = vpow.pop %v1566
        %v1568 = vadd.f32 %v1567, 1.0
        %v1569 = vrcp.pop %v1568
        %v1570 = vmul.f32 1.0, %v1569
        %v1571 = vtanh.pop %v1557
        %v1572 = vxor.u32 %v1558, 2147483648
        %v1573 = vmul.f32 %v1572, 1.442695
        %v1574 = vpow.pop %v1573
        %v1575 = vadd.f32 %v1574, 1.0
        %v1576 = vrcp.pop %v1575
        %v1577 = vmul.f32 1.0, %v1576
        %v1578 = vmul.f32 %v1570, %v1405
        %v1579 = vmul.f32 %v1564, %v1571
        %v1580 = vadd.f32 %v1578, %v1579
        %v1581 = vtanh.pop %v1580
        %v1582 = vmul.f32 %v1577, %v1581
        %1583 = vst [vmem:[%s306 + $0x20] sm:$0xff] %v1582
        %v1584 = vld [vmem:[#allocation2 + $0xa0] sm:$0xff]
        %v1585 = vld [vmem:[#allocation2 + $0xa8] sm:$0xff]
        %v1586 = vld [vmem:[#allocation2 + $0xb0] sm:$0xff]
        %v1587 = vld [vmem:[#allocation2 + $0xb8] sm:$0xff]
        %1588 = vmatprep.subr.mxu0 %v644
        %1589 = vmatpush1.msra.mxu0 %v643
        %1590 = vmatprep.subr.mxu0 %v648
        %1591 = vmatpush1.msra.mxu0 %v647
        %1592 = vmatprep.subr.mxu0 %v652
        %1593 = vmatpush1.msra.mxu0 %v651
        %1594 = vmatprep.subr.mxu0 %v656
        %1595 = vmatpush1.msra.mxu0 %v655
        %1596 = vmatprep.subr.mxu0 %v660
        %1597 = vmatpush1.msra.mxu0 %v659
        %1598 = vmatprep.subr.mxu0 %v664
        %1599 = vmatpush1.msra.mxu0 %v663
        %1600 = vmatprep.subr.mxu0 %v668
        %1601 = vmatpush1.msra.mxu0 %v667
        %1602 = vmatprep.subr.mxu0 %v672
        %1603 = vmatpush1.msra.mxu0 %v671
        %1604 = vmatprep.subr.mxu0 %v676
        %1605 = vmatpush1.msra.mxu0 %v675
        %1606 = vmatprep.subr.mxu0 %v680
        %1607 = vmatpush1.msra.mxu0 %v679
        %1608 = vmatprep.subr.mxu0 %v684
        %1609 = vmatpush1.msra.mxu0 %v683
        %1610 = vmatprep.subr.mxu0 %v688
        %1611 = vmatpush1.msra.mxu0 %v687
        %1612 = vmatprep.subr.mxu0 %v692
        %1613 = vmatpush1.msra.mxu0 %v691
        %1614 = vmatprep.subr.mxu0 %v696
        %1615 = vmatpush1.msra.mxu0 %v695
        %1616 = vmatprep.subr.mxu0 %v700
        %1617 = vmatpush1.msra.mxu0 %v699
        %1618 = vmatprep.subr.mxu0 %v704
        %1619 = vmatpush1.msra.mxu0 %v703
        %1620 = vmatprep.subr.mxu0 0.0
        %1621 = vmatpush1.msra.mxu0 0.0
        %1622 = vmatprep.subr.mxu0 0.0
        %1623 = vmatpush1.msra.mxu0 0.0
        %1624 = vmatprep.subr.mxu0 0.0
        %1625 = vmatpush1.msra.mxu0 0.0
        %1626 = vmatprep.subr.mxu0 0.0
        %1627 = vmatpush1.msra.mxu0 0.0
        %1628 = vmatprep.subr.mxu0 0.0
        %1629 = vmatpush1.msra.mxu0 0.0
        %1630 = vmatprep.subr.mxu0 0.0
        %1631 = vmatpush1.msra.mxu0 0.0
        %1632 = vmatprep.subr.mxu0 0.0
        %1633 = vmatpush1.msra.mxu0 0.0
        %1634 = vmatprep.subr.mxu0 0.0
        %1635 = vmatpush1.msra.mxu0 0.0
        %1636 = vmatprep.subr.mxu0 0.0
        %1637 = vmatpush1.msra.mxu0 0.0
        %1638 = vmatprep.subr.mxu0 0.0
        %1639 = vmatpush1.msra.mxu0 0.0
        %1640 = vmatprep.subr.mxu0 0.0
        %1641 = vmatpush1.msra.mxu0 0.0
        %1642 = vmatprep.subr.mxu0 0.0
        %1643 = vmatpush1.msra.mxu0 0.0
        %1644 = vmatprep.subr.mxu0 0.0
        %1645 = vmatpush1.msra.mxu0 0.0
        %1646 = vmatprep.subr.mxu0 0.0
        %1647 = vmatpush1.msra.mxu0 0.0
        %1648 = vmatprep.subr.mxu0 0.0
        %1649 = vmatpush1.msra.mxu0 0.0
        %1650 = vmatprep.subr.mxu0 0.0
        %1651 = vmatpush1.msra.mxu0 0.0
        %1652 = vmatprep.mubr.f32.mxu0 0.0
        %1653 = vmatmul.mubr.f32.gmra.mrb[0].mxu0 %v1582
        %v1654 = vpop.f32.mrb[0].mxu0
        %v1655 = vadd.f32 0.0, %v1654
        %v1656 = vpop.f32.mrb[0].mxu0
        %v1657 = vadd.f32 0.0, %v1656
        %1658 = vdwg.mxu0
        %1659 = vmatprep.subr.mxu0 %v646
        %1660 = vmatpush1.msra.mxu0 %v645
        %1661 = vmatprep.subr.mxu0 %v650
        %1662 = vmatpush1.msra.mxu0 %v649
        %1663 = vmatprep.subr.mxu0 %v654
        %1664 = vmatpush1.msra.mxu0 %v653
        %1665 = vmatprep.subr.mxu0 %v658
        %1666 = vmatpush1.msra.mxu0 %v657
        %1667 = vmatprep.subr.mxu0 %v662
        %1668 = vmatpush1.msra.mxu0 %v661
        %1669 = vmatprep.subr.mxu0 %v666
        %1670 = vmatpush1.msra.mxu0 %v665
        %1671 = vmatprep.subr.mxu0 %v670
        %1672 = vmatpush1.msra.mxu0 %v669
        %1673 = vmatprep.subr.mxu0 %v674
        %1674 = vmatpush1.msra.mxu0 %v673
        %1675 = vmatprep.subr.mxu0 %v678
        %1676 = vmatpush1.msra.mxu0 %v677
        %1677 = vmatprep.subr.mxu0 %v682
        %1678 = vmatpush1.msra.mxu0 %v681
        %1679 = vmatprep.subr.mxu0 %v686
        %1680 = vmatpush1.msra.mxu0 %v685
        %1681 = vmatprep.subr.mxu0 %v690
        %1682 = vmatpush1.msra.mxu0 %v689
        %1683 = vmatprep.subr.mxu0 %v694
        %1684 = vmatpush1.msra.mxu0 %v693
        %1685 = vmatprep.subr.mxu0 %v698
        %1686 = vmatpush1.msra.mxu0 %v697
        %1687 = vmatprep.subr.mxu0 %v702
        %1688 = vmatpush1.msra.mxu0 %v701
        %1689 = vmatprep.subr.mxu0 %v706
        %1690 = vmatpush1.msra.mxu0 %v705
        %1691 = vmatprep.subr.mxu0 0.0
        %1692 = vmatpush1.msra.mxu0 0.0
        %1693 = vmatprep.subr.mxu0 0.0
        %1694 = vmatpush1.msra.mxu0 0.0
        %1695 = vmatprep.subr.mxu0 0.0
        %1696 = vmatpush1.msra.mxu0 0.0
        %1697 = vmatprep.subr.mxu0 0.0
        %1698 = vmatpush1.msra.mxu0 0.0
        %1699 = vmatprep.subr.mxu0 0.0
        %1700 = vmatpush1.msra.mxu0 0.0
        %1701 = vmatprep.subr.mxu0 0.0
        %1702 = vmatpush1.msra.mxu0 0.0
        %1703 = vmatprep.subr.mxu0 0.0
        %1704 = vmatpush1.msra.mxu0 0.0
        %1705 = vmatprep.subr.mxu0 0.0
        %1706 = vmatpush1.msra.mxu0 0.0
        %1707 = vmatprep.subr.mxu0 0.0
        %1708 = vmatpush1.msra.mxu0 0.0
        %1709 = vmatprep.subr.mxu0 0.0
        %1710 = vmatpush1.msra.mxu0 0.0
        %1711 = vmatprep.subr.mxu0 0.0
        %1712 = vmatpush1.msra.mxu0 0.0
        %1713 = vmatprep.subr.mxu0 0.0
        %1714 = vmatpush1.msra.mxu0 0.0
        %1715 = vmatprep.subr.mxu0 0.0
        %1716 = vmatpush1.msra.mxu0 0.0
        %1717 = vmatprep.subr.mxu0 0.0
        %1718 = vmatpush1.msra.mxu0 0.0
        %1719 = vmatprep.subr.mxu0 0.0
        %1720 = vmatpush1.msra.mxu0 0.0
        %1721 = vmatprep.subr.mxu0 0.0
        %1722 = vmatpush1.msra.mxu0 0.0
        %1723 = vmatprep.mubr.f32.mxu0 0.0
        %1724 = vmatmul.mubr.f32.gmra.mrb[0].mxu0 %v1582
        %v1725 = vpop.f32.mrb[0].mxu0
        %v1726 = vadd.f32 0.0, %v1725
        %v1727 = vpop.f32.mrb[0].mxu0
        %v1728 = vadd.f32 0.0, %v1727
        %1729 = vdwg.mxu0
        %v1730 = vadd.f32 %v1584, %v1655
        %v1731 = vadd.f32 %v1585, %v1657
        %v1732 = vadd.f32 %v1586, %v1726
        %v1733 = vadd.f32 %v1587, %v1728
        %v1734 = vxor.u32 %v1730, 2147483648
        %v1735 = vmul.f32 %v1734, 1.442695
        %v1736 = vpow.pop %v1735
        %v1737 = vadd.f32 %v1736, 1.0
        %v1738 = vrcp.pop %v1737
        %v1739 = vmul.f32 1.0, %v1738
        %v1740 = vxor.u32 %v1731, 2147483648
        %v1741 = vmul.f32 %v1740, 1.442695
        %v1742 = vpow.pop %v1741
        %v1743 = vadd.f32 %v1742, 1.0
        %v1744 = vrcp.pop %v1743
        %v1745 = vmul.f32 1.0, %v1744
        %v1746 = vtanh.pop %v1732
        %v1747 = vxor.u32 %v1733, 2147483648
        %v1748 = vmul.f32 %v1747, 1.442695
        %v1749 = vpow.pop %v1748
        %v1750 = vadd.f32 %v1749, 1.0
        %v1751 = vrcp.pop %v1750
        %v1752 = vmul.f32 1.0, %v1751
        %v1753 = vmul.f32 %v1745, %v1580
        %v1754 = vmul.f32 %v1739, %v1746
        %v1755 = vadd.f32 %v1753, %v1754
        %v1756 = vtanh.pop %v1755
        %v1757 = vmul.f32 %v1752, %v1756
        %1758 = vst [vmem:[%s306 + $0x28] sm:$0xff] %v1757
        %v1759 = vld [vmem:[#allocation2 + $0xc0] sm:$0xff]
        %v1760 = vld [vmem:[#allocation2 + $0xc8] sm:$0xff]
        %v1761 = vld [vmem:[#allocation2 + $0xd0] sm:$0xff]
        %v1762 = vld [vmem:[#allocation2 + $0xd8] sm:$0xff]
        %1763 = vmatprep.subr.mxu0 %v644
        %1764 = vmatpush1.msra.mxu0 %v643
        %1765 = vmatprep.subr.mxu0 %v648
        %1766 = vmatpush1.msra.mxu0 %v647
        %1767 = vmatprep.subr.mxu0 %v652
        %1768 = vmatpush1.msra.mxu0 %v651
        %1769 = vmatprep.subr.mxu0 %v656
        %1770 = vmatpush1.msra.mxu0 %v655
        %1771 = vmatprep.subr.mxu0 %v660
        %1772 = vmatpush1.msra.mxu0 %v659
        %1773 = vmatprep.subr.mxu0 %v664
        %1774 = vmatpush1.msra.mxu0 %v663
        %1775 = vmatprep.subr.mxu0 %v668
        %1776 = vmatpush1.msra.mxu0 %v667
        %1777 = vmatprep.subr.mxu0 %v672
        %1778 = vmatpush1.msra.mxu0 %v671
        %1779 = vmatprep.subr.mxu0 %v676
        %1780 = vmatpush1.msra.mxu0 %v675
        %1781 = vmatprep.subr.mxu0 %v680
        %1782 = vmatpush1.msra.mxu0 %v679
        %1783 = vmatprep.subr.mxu0 %v684
        %1784 = vmatpush1.msra.mxu0 %v683
        %1785 = vmatprep.subr.mxu0 %v688
        %1786 = vmatpush1.msra.mxu0 %v687
        %1787 = vmatprep.subr.mxu0 %v692
        %1788 = vmatpush1.msra.mxu0 %v691
        %1789 = vmatprep.subr.mxu0 %v696
        %1790 = vmatpush1.msra.mxu0 %v695
        %1791 = vmatprep.subr.mxu0 %v700
        %1792 = vmatpush1.msra.mxu0 %v699
        %1793 = vmatprep.subr.mxu0 %v704
        %1794 = vmatpush1.msra.mxu0 %v703
        %1795 = vmatprep.subr.mxu0 0.0
        %1796 = vmatpush1.msra.mxu0 0.0
        %1797 = vmatprep.subr.mxu0 0.0
        %1798 = vmatpush1.msra.mxu0 0.0
        %1799 = vmatprep.subr.mxu0 0.0
        %1800 = vmatpush1.msra.mxu0 0.0
        %1801 = vmatprep.subr.mxu0 0.0
        %1802 = vmatpush1.msra.mxu0 0.0
        %1803 = vmatprep.subr.mxu0 0.0
        %1804 = vmatpush1.msra.mxu0 0.0
        %1805 = vmatprep.subr.mxu0 0.0
        %1806 = vmatpush1.msra.mxu0 0.0
        %1807 = vmatprep.subr.mxu0 0.0
        %1808 = vmatpush1.msra.mxu0 0.0
        %1809 = vmatprep.subr.mxu0 0.0
        %1810 = vmatpush1.msra.mxu0 0.0
        %1811 = vmatprep.subr.mxu0 0.0
        %1812 = vmatpush1.msra.mxu0 0.0
        %1813 = vmatprep.subr.mxu0 0.0
        %1814 = vmatpush1.msra.mxu0 0.0
        %1815 = vmatprep.subr.mxu0 0.0
        %1816 = vmatpush1.msra.mxu0 0.0
        %1817 = vmatprep.subr.mxu0 0.0
        %1818 = vmatpush1.msra.mxu0 0.0
        %1819 = vmatprep.subr.mxu0 0.0
        %1820 = vmatpush1.msra.mxu0 0.0
        %1821 = vmatprep.subr.mxu0 0.0
        %1822 = vmatpush1.msra.mxu0 0.0
        %1823 = vmatprep.subr.mxu0 0.0
        %1824 = vmatpush1.msra.mxu0 0.0
        %1825 = vmatprep.subr.mxu0 0.0
        %1826 = vmatpush1.msra.mxu0 0.0
        %1827 = vmatprep.mubr.f32.mxu0 0.0
        %1828 = vmatmul.mubr.f32.gmra.mrb[0].mxu0 %v1757
        %v1829 = vpop.f32.mrb[0].mxu0
        %v1830 = vadd.f32 0.0, %v1829
        %v1831 = vpop.f32.mrb[0].mxu0
        %v1832 = vadd.f32 0.0, %v1831
        %1833 = vdwg.mxu0
        %1834 = vmatprep.subr.mxu0 %v646
        %1835 = vmatpush1.msra.mxu0 %v645
        %1836 = vmatprep.subr.mxu0 %v650
        %1837 = vmatpush1.msra.mxu0 %v649
        %1838 = vmatprep.subr.mxu0 %v654
        %1839 = vmatpush1.msra.mxu0 %v653
        %1840 = vmatprep.subr.mxu0 %v658
        %1841 = vmatpush1.msra.mxu0 %v657
        %1842 = vmatprep.subr.mxu0 %v662
        %1843 = vmatpush1.msra.mxu0 %v661
        %1844 = vmatprep.subr.mxu0 %v666
        %1845 = vmatpush1.msra.mxu0 %v665
        %1846 = vmatprep.subr.mxu0 %v670
        %1847 = vmatpush1.msra.mxu0 %v669
        %1848 = vmatprep.subr.mxu0 %v674
        %1849 = vmatpush1.msra.mxu0 %v673
        %1850 = vmatprep.subr.mxu0 %v678
        %1851 = vmatpush1.msra.mxu0 %v677
        %1852 = vmatprep.subr.mxu0 %v682
        %1853 = vmatpush1.msra.mxu0 %v681
        %1854 = vmatprep.subr.mxu0 %v686
        %1855 = vmatpush1.msra.mxu0 %v685
        %1856 = vmatprep.subr.mxu0 %v690
        %1857 = vmatpush1.msra.mxu0 %v689
        %1858 = vmatprep.subr.mxu0 %v694
        %1859 = vmatpush1.msra.mxu0 %v693
        %1860 = vmatprep.subr.mxu0 %v698
        %1861 = vmatpush1.msra.mxu0 %v697
        %1862 = vmatprep.subr.mxu0 %v702
        %1863 = vmatpush1.msra.mxu0 %v701
        %1864 = vmatprep.subr.mxu0 %v706
        %1865 = vmatpush1.msra.mxu0 %v705
        %1866 = vmatprep.subr.mxu0 0.0
        %1867 = vmatpush1.msra.mxu0 0.0
        %1868 = vmatprep.subr.mxu0 0.0
        %1869 = vmatpush1.msra.mxu0 0.0
        %1870 = vmatprep.subr.mxu0 0.0
        %1871 = vmatpush1.msra.mxu0 0.0
        %1872 = vmatprep.subr.mxu0 0.0
        %1873 = vmatpush1.msra.mxu0 0.0
        %1874 = vmatprep.subr.mxu0 0.0
        %1875 = vmatpush1.msra.mxu0 0.0
        %1876 = vmatprep.subr.mxu0 0.0
        %1877 = vmatpush1.msra.mxu0 0.0
        %1878 = vmatprep.subr.mxu0 0.0
        %1879 = vmatpush1.msra.mxu0 0.0
        %1880 = vmatprep.subr.mxu0 0.0
        %1881 = vmatpush1.msra.mxu0 0.0
        %1882 = vmatprep.subr.mxu0 0.0
        %1883 = vmatpush1.msra.mxu0 0.0
        %1884 = vmatprep.subr.mxu0 0.0
        %1885 = vmatpush1.msra.mxu0 0.0
        %1886 = vmatprep.subr.mxu0 0.0
        %1887 = vmatpush1.msra.mxu0 0.0
        %1888 = vmatprep.subr.mxu0 0.0
        %1889 = vmatpush1.msra.mxu0 0.0
        %1890 = vmatprep.subr.mxu0 0.0
        %1891 = vmatpush1.msra.mxu0 0.0
        %1892 = vmatprep.subr.mxu0 0.0
        %1893 = vmatpush1.msra.mxu0 0.0
        %1894 = vmatprep.subr.mxu0 0.0
        %1895 = vmatpush1.msra.mxu0 0.0
        %1896 = vmatprep.subr.mxu0 0.0
        %1897 = vmatpush1.msra.mxu0 0.0
        %1898 = vmatprep.mubr.f32.mxu0 0.0
        %1899 = vmatmul.mubr.f32.gmra.mrb[0].mxu0 %v1757
        %v1900 = vpop.f32.mrb[0].mxu0
        %v1901 = vadd.f32 0.0, %v1900
        %v1902 = vpop.f32.mrb[0].mxu0
        %v1903 = vadd.f32 0.0, %v1902
        %1904 = vdwg.mxu0
        %v1905 = vadd.f32 %v1759, %v1830
        %v1906 = vadd.f32 %v1760, %v1832
        %v1907 = vadd.f32 %v1761, %v1901
        %v1908 = vadd.f32 %v1762, %v1903
        %v1909 = vxor.u32 %v1905, 2147483648
        %v1910 = vmul.f32 %v1909, 1.442695
        %v1911 = vpow.pop %v1910
        %v1912 = vadd.f32 %v1911, 1.0
        %v1913 = vrcp.pop %v1912
        %v1914 = vmul.f32 1.0, %v1913
        %v1915 = vxor.u32 %v1906, 2147483648
        %v1916 = vmul.f32 %v1915, 1.442695
        %v1917 = vpow.pop %v1916
        %v1918 = vadd.f32 %v1917, 1.0
        %v1919 = vrcp.pop %v1918
        %v1920 = vmul.f32 1.0, %v1919
        %v1921 = vtanh.pop %v1907
        %v1922 = vxor.u32 %v1908, 2147483648
        %v1923 = vmul.f32 %v1922, 1.442695
        %v1924 = vpow.pop %v1923
        %v1925 = vadd.f32 %v1924, 1.0
        %v1926 = vrcp.pop %v1925
        %v1927 = vmul.f32 1.0, %v1926
        %v1928 = vmul.f32 %v1920, %v1755
        %v1929 = vmul.f32 %v1914, %v1921
        %v1930 = vadd.f32 %v1928, %v1929
        %v1931 = vtanh.pop %v1930
        %v1932 = vmul.f32 %v1927, %v1931
        %1933 = vst [vmem:[%s306 + $0x30] sm:$0xff] %v1932
        %v1934 = vld [vmem:[#allocation2 + $0xe0] sm:$0xff]
        %v1935 = vld [vmem:[#allocation2 + $0xe8] sm:$0xff]
        %v1936 = vld [vmem:[#allocation2 + $0xf0] sm:$0xff]
        %v1937 = vld [vmem:[#allocation2 + $0xf8] sm:$0xff]
        %1938 = vmatprep.subr.mxu0 %v644
        %1939 = vmatpush1.msra.mxu0 %v643
        %1940 = vmatprep.subr.mxu0 %v648
        %1941 = vmatpush1.msra.mxu0 %v647
        %1942 = vmatprep.subr.mxu0 %v652
        %1943 = vmatpush1.msra.mxu0 %v651
        %1944 = vmatprep.subr.mxu0 %v656
        %1945 = vmatpush1.msra.mxu0 %v655
        %1946 = vmatprep.subr.mxu0 %v660
        %1947 = vmatpush1.msra.mxu0 %v659
        %1948 = vmatprep.subr.mxu0 %v664
        %1949 = vmatpush1.msra.mxu0 %v663
        %1950 = vmatprep.subr.mxu0 %v668
        %1951 = vmatpush1.msra.mxu0 %v667
        %1952 = vmatprep.subr.mxu0 %v672
        %1953 = vmatpush1.msra.mxu0 %v671
        %1954 = vmatprep.subr.mxu0 %v676
        %1955 = vmatpush1.msra.mxu0 %v675
        %1956 = vmatprep.subr.mxu0 %v680
        %1957 = vmatpush1.msra.mxu0 %v679
        %1958 = vmatprep.subr.mxu0 %v684
        %1959 = vmatpush1.msra.mxu0 %v683
        %1960 = vmatprep.subr.mxu0 %v688
        %1961 = vmatpush1.msra.mxu0 %v687
        %1962 = vmatprep.subr.mxu0 %v692
        %1963 = vmatpush1.msra.mxu0 %v691
        %1964 = vmatprep.subr.mxu0 %v696
        %1965 = vmatpush1.msra.mxu0 %v695
        %1966 = vmatprep.subr.mxu0 %v700
        %1967 = vmatpush1.msra.mxu0 %v699
        %1968 = vmatprep.subr.mxu0 %v704
        %1969 = vmatpush1.msra.mxu0 %v703
        %1970 = vmatprep.subr.mxu0 0.0
        %1971 = vmatpush1.msra.mxu0 0.0
        %1972 = vmatprep.subr.mxu0 0.0
        %1973 = vmatpush1.msra.mxu0 0.0
        %1974 = vmatprep.subr.mxu0 0.0
        %1975 = vmatpush1.msra.mxu0 0.0
        %1976 = vmatprep.subr.mxu0 0.0
        %1977 = vmatpush1.msra.mxu0 0.0
        %1978 = vmatprep.subr.mxu0 0.0
        %1979 = vmatpush1.msra.mxu0 0.0
        %1980 = vmatprep.subr.mxu0 0.0
        %1981 = vmatpush1.msra.mxu0 0.0
        %1982 = vmatprep.subr.mxu0 0.0
        %1983 = vmatpush1.msra.mxu0 0.0
        %1984 = vmatprep.subr.mxu0 0.0
        %1985 = vmatpush1.msra.mxu0 0.0
        %1986 = vmatprep.subr.mxu0 0.0
        %1987 = vmatpush1.msra.mxu0 0.0
        %1988 = vmatprep.subr.mxu0 0.0
        %1989 = vmatpush1.msra.mxu0 0.0
        %1990 = vmatprep.subr.mxu0 0.0
        %1991 = vmatpush1.msra.mxu0 0.0
        %1992 = vmatprep.subr.mxu0 0.0
        %1993 = vmatpush1.msra.mxu0 0.0
        %1994 = vmatprep.subr.mxu0 0.0
        %1995 = vmatpush1.msra.mxu0 0.0
        %1996 = vmatprep.subr.mxu0 0.0
        %1997 = vmatpush1.msra.mxu0 0.0
        %1998 = vmatprep.subr.mxu0 0.0
        %1999 = vmatpush1.msra.mxu0 0.0
        %2000 = vmatprep.subr.mxu0 0.0
        %2001 = vmatpush1.msra.mxu0 0.0
        %2002 = vmatprep.mubr.f32.mxu0 0.0
        %2003 = vmatmul.mubr.f32.gmra.mrb[0].mxu0 %v1932
        %v2004 = vpop.f32.mrb[0].mxu0
        %v2005 = vadd.f32 0.0, %v2004
        %v2006 = vpop.f32.mrb[0].mxu0
        %v2007 = vadd.f32 0.0, %v2006
        %2008 = vdwg.mxu0
        %2009 = vmatprep.subr.mxu0 %v646
        %2010 = vmatpush1.msra.mxu0 %v645
        %2011 = vmatprep.subr.mxu0 %v650
        %2012 = vmatpush1.msra.mxu0 %v649
        %2013 = vmatprep.subr.mxu0 %v654
        %2014 = vmatpush1.msra.mxu0 %v653
        %2015 = vmatprep.subr.mxu0 %v658
        %2016 = vmatpush1.msra.mxu0 %v657
        %2017 = vmatprep.subr.mxu0 %v662
        %2018 = vmatpush1.msra.mxu0 %v661
        %2019 = vmatprep.subr.mxu0 %v666
        %2020 = vmatpush1.msra.mxu0 %v665
        %2021 = vmatprep.subr.mxu0 %v670
        %2022 = vmatpush1.msra.mxu0 %v669
        %2023 = vmatprep.subr.mxu0 %v674
        %2024 = vmatpush1.msra.mxu0 %v673
        %2025 = vmatprep.subr.mxu0 %v678
        %2026 = vmatpush1.msra.mxu0 %v677
        %2027 = vmatprep.subr.mxu0 %v682
        %2028 = vmatpush1.msra.mxu0 %v681
        %2029 = vmatprep.subr.mxu0 %v686
        %2030 = vmatpush1.msra.mxu0 %v685
        %2031 = vmatprep.subr.mxu0 %v690
        %2032 = vmatpush1.msra.mxu0 %v689
        %2033 = vmatprep.subr.mxu0 %v694
        %2034 = vmatpush1.msra.mxu0 %v693
        %2035 = vmatprep.subr.mxu0 %v698
        %2036 = vmatpush1.msra.mxu0 %v697
        %2037 = vmatprep.subr.mxu0 %v702
        %2038 = vmatpush1.msra.mxu0 %v701
        %2039 = vmatprep.subr.mxu0 %v706
        %2040 = vmatpush1.msra.mxu0 %v705
        %2041 = vmatprep.subr.mxu0 0.0
        %2042 = vmatpush1.msra.mxu0 0.0
        %2043 = vmatprep.subr.mxu0 0.0
        %2044 = vmatpush1.msra.mxu0 0.0
        %2045 = vmatprep.subr.mxu0 0.0
        %2046 = vmatpush1.msra.mxu0 0.0
        %2047 = vmatprep.subr.mxu0 0.0
        %2048 = vmatpush1.msra.mxu0 0.0
        %2049 = vmatprep.subr.mxu0 0.0
        %2050 = vmatpush1.msra.mxu0 0.0
        %2051 = vmatprep.subr.mxu0 0.0
        %2052 = vmatpush1.msra.mxu0 0.0
        %2053 = vmatprep.subr.mxu0 0.0
        %2054 = vmatpush1.msra.mxu0 0.0
        %2055 = vmatprep.subr.mxu0 0.0
        %2056 = vmatpush1.msra.mxu0 0.0
        %2057 = vmatprep.subr.mxu0 0.0
        %2058 = vmatpush1.msra.mxu0 0.0
        %2059 = vmatprep.subr.mxu0 0.0
        %2060 = vmatpush1.msra.mxu0 0.0
        %2061 = vmatprep.subr.mxu0 0.0
        %2062 = vmatpush1.msra.mxu0 0.0
        %2063 = vmatprep.subr.mxu0 0.0
        %2064 = vmatpush1.msra.mxu0 0.0
        %2065 = vmatprep.subr.mxu0 0.0
        %2066 = vmatpush1.msra.mxu0 0.0
        %2067 = vmatprep.subr.mxu0 0.0
        %2068 = vmatpush1.msra.mxu0 0.0
        %2069 = vmatprep.subr.mxu0 0.0
        %2070 = vmatpush1.msra.mxu0 0.0
        %2071 = vmatprep.subr.mxu0 0.0
        %2072 = vmatpush1.msra.mxu0 0.0
        %2073 = vmatprep.mubr.f32.mxu0 0.0
        %2074 = vmatmul.mubr.f32.gmra.mrb[0].mxu0 %v1932
        %v2075 = vpop.f32.mrb[0].mxu0
        %v2076 = vadd.f32 0.0, %v2075
        %v2077 = vpop.f32.mrb[0].mxu0
        %v2078 = vadd.f32 0.0, %v2077
        %2079 = vdwg.mxu0
        %v2080 = vadd.f32 %v1934, %v2005
        %v2081 = vadd.f32 %v1935, %v2007
        %v2082 = vadd.f32 %v1936, %v2076
        %v2083 = vadd.f32 %v1937, %v2078
        %v2084 = vxor.u32 %v2080, 2147483648
        %v2085 = vmul.f32 %v2084, 1.442695
        %v2086 = vpow.pop %v2085
        %v2087 = vadd.f32 %v2086, 1.0
        %v2088 = vrcp.pop %v2087
        %v2089 = vmul.f32 1.0, %v2088
        %v2090 = vxor.u32 %v2081, 2147483648
        %v2091 = vmul.f32 %v2090, 1.442695
        %v2092 = vpow.pop %v2091
        %v2093 = vadd.f32 %v2092, 1.0
        %v2094 = vrcp.pop %v2093
        %v2095 = vmul.f32 1.0, %v2094
        %v2096 = vtanh.pop %v2082
        %v2097 = vxor.u32 %v2083, 2147483648
        %v2098 = vmul.f32 %v2097, 1.442695
        %v2099 = vpow.pop %v2098
        %v2100 = vadd.f32 %v2099, 1.0
        %v2101 = vrcp.pop %v2100
        %v2102 = vmul.f32 1.0, %v2101
        %v2103 = vmul.f32 %v2095, %v1930
        %v2104 = vmul.f32 %v2089, %v2096
        %v2105 = vadd.f32 %v2103, %v2104
        %v2106 = vtanh.pop %v2105
        %v2107 = vmul.f32 %v2102, %v2106
        %2108 = vst [vmem:[%s306 + $0x38] sm:$0xff] %v2107
        %2109 = vst [vmem:[#allocation3] sm:$0xff] %v2107
        %2110 = vst [vmem:[#allocation4] sm:$0xff] %v2105
        %2111 = vst [vmem:[#allocation9] sm:$0xff] %v2107
        %2112 = vst [vmem:[#allocation11] sm:$0xff] %v2105
        %s2113 = sand.u32 %s164, 1
        %s2114 = scalar_lea.sflag [#allocation7], %s2113
        %s2115 = sand.u32 %s164, 1
        %s2116 = smul.addr %s2115, 64
        %s2117 = scalar_lea.vmem [#allocation8], %s2116
        // Predicated region
        $region53: #{tpu_custom_call.1} parent=43 // pred_check
          %p2118 = pneg %p174
        $region54: #{tpu_custom_call.1} parent=43 // pred_check_branch
          %2120 = sbr.rel (%p2118) target = $region56
        $region55: #{tpu_custom_call.1} parent=43 // pred_region
          %s2121 = smul.u32 8, %s25
          %s2123 = ssub.s32 1024, 1024
          %2124 = vsyncadd %s2114, %s2123
          %s2125 = smul.addr %s2121, 128
          %s2126 = scalar_lea.hbm %s6, %s2125
          %s2127 = sshll.u32 %s2117, 4
          %s2128 = int_to_ptr.vmem [resolvable:$true] %s2127
          %2133 = dma.vmem_to_hbm [thread:$0]  %s2128, 1024, %s2126, %s2114, 128, 128, 8
        $region56: #{tpu_custom_call.1} parent=43 // pred_fallthru
          _
        // Predicated region
        $region57: #{tpu_custom_call.1} parent=43 // pred_check
          %p2134 = pneg %p195
        $region58: #{tpu_custom_call.1} parent=43 // pred_check_branch
          %2136 = sbr.rel (%p2134) target = $region60
        $region59: #{tpu_custom_call.1} parent=43 // pred_region
          %s2138 = ssub.s32 128, 128
          %2139 = vsyncadd [#allocation10], %s2138
          %s2141 = sshll.u32 [#allocation9], 4
          %s2142 = int_to_ptr.vmem [resolvable:$true] %s2141
          %2144 = dma.vmem_to_hbm [thread:$0]  %s2142, 128, %s7, [#allocation10]
        $region60: #{tpu_custom_call.1} parent=43 // pred_fallthru
          _
        // Predicated region
        $region61: #{tpu_custom_call.1} parent=43 // pred_check
          %p2145 = pneg %p216
        $region62: #{tpu_custom_call.1} parent=43 // pred_check_branch
          %2147 = sbr.rel (%p2145) target = $region64
        $region63: #{tpu_custom_call.1} parent=43 // pred_region
          %s2149 = ssub.s32 128, 128
          %2150 = vsyncadd [#allocation10], %s2149
          %s2152 = sshll.u32 [#allocation11], 4
          %s2153 = int_to_ptr.vmem [resolvable:$true] %s2152
          %2155 = dma.vmem_to_hbm [thread:$0]  %s2153, 128, %s8, [#allocation10]
        $region64: #{tpu_custom_call.1} parent=43 // pred_fallthru
          _
        // Predicated region
        $region65: #{tpu_custom_call.1} parent=43 // pred_check
          %p2156 = pneg %p195
        $region66: #{tpu_custom_call.1} parent=43 // pred_check_branch
          %2158 = sbr.rel (%p2156) target = $region68
        $region67: #{tpu_custom_call.1} parent=43 // pred_region
          %2159 = dma.done [#allocation10], 128
        $region68: #{tpu_custom_call.1} parent=43 // pred_fallthru
          _
        // Predicated region
        $region69: #{tpu_custom_call.1} parent=43 // pred_check
          %p2160 = pneg %p216
        $region70: #{tpu_custom_call.1} parent=43 // pred_check_branch
          %2162 = sbr.rel (%p2160) target = $region72
        $region71: #{tpu_custom_call.1} parent=43 // pred_region
          %2163 = dma.done [#allocation10], 128
        $region72: #{tpu_custom_call.1} parent=43 // pred_fallthru
          _
      $region44: #{tpu_custom_call.1} parent=5 // pred_fallthru
        _
      %p2164 = scmp.le.s32.totalorder 2, %s20
      // Predicated region
      $region73: #{tpu_custom_call.1} parent=5 // pred_check
        %p2165 = pneg %p2164
      $region74: #{tpu_custom_call.1} parent=5 // pred_check_branch
        %2167 = sbr.rel (%p2165) target = $region76
      $region75: #{tpu_custom_call.1} parent=5 // pred_region
        %s2168 = ssub.s32 %s20, 2
        // Predicated region
        $region77: #{tpu_custom_call.1} parent=75 // pred_check
          %p2169 = pneg %p180
        $region78: #{tpu_custom_call.1} parent=75 // pred_check_branch
          %2171 = sbr.rel (%p2169) target = $region80
        $region79: #{tpu_custom_call.1} parent=75 // pred_region
          %s2172 = sand.u32 %s165, 1
          %s2173 = scalar_lea.sflag [#allocation7], %s2172
          %s2174 = sand.u32 %s165, 1
          %s2175 = smul.addr %s2174, 64
          %s2176 = scalar_lea.vmem [#allocation8], %s2175
          %2177 = dma.done %s2173, 1024
        $region80: #{tpu_custom_call.1} parent=75 // pred_fallthru
          _
      $region76: #{tpu_custom_call.1} parent=5 // pred_fallthru
        _
    $region6: #{tpu_custom_call.1} parent=1 // loop_footer
      %s24 = sadd.s32 1, %s20
    $region7: #{tpu_custom_call.1} parent=1 // loop_footer_branch
      %19 = sbr.rel target = $region3
    $region8: #{tpu_custom_call.1} parent=1 // loop_exit
      _
    %2178 = vsyncpa [#allocation6], 1
    %s2179 = scalar_lea.sflag [#allocation6], 1
    %2180 = vsyncpa %s2179, 1
    %2181 = vsyncpa [#allocation7], 1
    %s2182 = scalar_lea.sflag [#allocation7], 1
    %2183 = vsyncpa %s2182, 1
    %2184 = vsyncpa [#allocation10], 1

</llo_original>
